<compile_context>
chip_gen: v5e
topology: v5e:2x2
jax: 0.10.0
libtpu: 0.0.40
codegen_flags: <defaults>
</compile_context>

<pallas_src>
import jax
import jax.numpy as jnp
from jax import lax
from jax.experimental import pallas as pl
from jax.experimental.pallas import tpu as pltpu


# ---------------------------------------------------------------------------
# Fully fused kernel: input projection + 2-layer LSTM recurrence + flip
# ---------------------------------------------------------------------------
def _fused_encoder_kernel(x_ref, wih0_ref, b0_ref, whh0_ref,
                          wih1_ref, whh1_ref, b1_ref,
                          y_ref, hn_ref, cn_ref,
                          gx0_scr, y_scr):
    """Fused 2-layer LSTM over the whole sequence (single invocation).

    x_ref:    (B, T, F)   input sequence (f32)
    wih0_ref: (F, 4H)     layer-0 input->gates weight   (bf16, gate-permuted)
    b0_ref:   (1, 4H)     layer-0 combined bias          (f32,  gate-permuted)
    whh0_ref: (H, 4H)     layer-0 hidden->gates weight  (bf16, gate-permuted)
    wih1_ref: (H, 4H)     layer-1 input->gates weight   (bf16, gate-permuted)
    whh1_ref: (H, 4H)     layer-1 hidden->gates weight  (bf16, gate-permuted)
    b1_ref:   (1, 4H)     layer-1 combined bias          (f32,  gate-permuted)
    y_ref:    (B, T, H)   final-layer hiddens, TIME-FLIPPED (torch.flip folded)
    hn_ref:   (2, B, H)   final hidden states (layer 0, layer 1)
    cn_ref:   (2, B, H)   final cell states   (layer 0, layer 1)
    gx0_scr:  (T, B, 4H)  VMEM scratch, pre-computed layer-0 input gates
    y_scr:    (T, B, H)   VMEM scratch, per-step layer-1 hiddens
    """
    B, T, F = x_ref.shape
    H4 = whh0_ref.shape[1]
    H = H4 // 4

    # ---- prologue (off the serial path): layer-0 input projection --------
    # One MXU dot for all timesteps; result lives in VMEM scratch.
    xt = jnp.transpose(x_ref[...], (1, 0, 2))                 # (T, B, F) f32
    x2 = xt.reshape(T * B, F).astype(jnp.bfloat16)            # (T*B, F) bf16
    gx = jnp.dot(x2, wih0_ref[...],
                 preferred_element_type=jnp.float32)          # (T*B, 4H) f32
    gx = gx + b0_ref[...]                                     # bias folded once
    gx0_scr[...] = gx.reshape(T, B, H4)

    # ---- hoisted loop invariants (no per-unrolled-step vld / broadcast) --
    whh0 = whh0_ref[...]                                      # (H, 4H) bf16
    wih1 = wih1_ref[...]                                      # (H, 4H) bf16
    whh1 = whh1_ref[...]                                      # (H, 4H) bf16
    b1b = jnp.broadcast_to(b1_ref[...], (B, H4))              # (B, 4H) f32

    def gate_nonlin(gates):
        # Columns permuted to (i, f, o | g): one wide sigmoid, one tanh.
        sig = jax.nn.sigmoid(gates[:, :3 * H])
        g = jnp.tanh(gates[:, 3 * H:])
        return sig[:, 0 * H:1 * H], sig[:, 1 * H:2 * H], sig[:, 2 * H:3 * H], g

    def step(t, carry):
        h0, c0, h1, c1 = carry

        # ---- layer 0 (input projection already in gx0_scr) ----
        gates0 = gx0_scr[t] + jnp.dot(h0.astype(jnp.bfloat16), whh0,
                                      preferred_element_type=jnp.float32)
        i0, f0, o0, g0 = gate_nonlin(gates0)
        c0 = f0 * c0 + i0 * g0
        h0 = o0 * jnp.tanh(c0)

        # ---- layer 1: two accumulated dots (no per-step lane concat) ----
        gates1 = (jnp.dot(h0.astype(jnp.bfloat16), wih1,
                          preferred_element_type=jnp.float32)
                  + jnp.dot(h1.astype(jnp.bfloat16), whh1,
                            preferred_element_type=jnp.float32)
                  + b1b)
        i1, f1, o1, g1 = gate_nonlin(gates1)
        c1 = f1 * c1 + i1 * g1
        h1 = o1 * jnp.tanh(c1)

        # torch.flip(output, [1]) folded into the scratch store index.
        y_scr[T - 1 - t] = h1
        return h0, c0, h1, c1

    zeros = jnp.zeros((B, H), jnp.float32)
    # T is small and static -> full unroll so the LLO scheduler can overlap
    # layer-0 of step t+1 with layer-1 of step t.  Cap unroll for long T.
    h0, c0, h1, c1 = lax.fori_loop(0, T, step, (zeros, zeros, zeros, zeros),
                                   unroll=True)

    # ---- epilogue: single-shot stores ------------------------------------
    y_ref[...] = jnp.transpose(y_scr[...], (1, 0, 2)).astype(y_ref.dtype)
    hn_ref[0] = h0.astype(hn_ref.dtype)
    hn_ref[1] = h1.astype(hn_ref.dtype)
    cn_ref[0] = c0.astype(cn_ref.dtype)
    cn_ref[1] = c1.astype(cn_ref.dtype)


def _fused_encoder_pallas(x, wih0_b, b0, whh0_b, wih1_b, whh1_b, b1):
    """Single-launch fused 2-layer LSTM. Everything resident in VMEM."""
    B, T, F = x.shape
    H = whh0_b.shape[0]
    vmem = lambda: pl.BlockSpec(memory_space=pltpu.MemorySpace.VMEM)
    return pl.pallas_call(
        _fused_encoder_kernel,
        out_shape=(
            jax.ShapeDtypeStruct((B, T, H), jnp.float32),   # y (time-flipped)
            jax.ShapeDtypeStruct((2, B, H), jnp.float32),   # hn
            jax.ShapeDtypeStruct((2, B, H), jnp.float32),   # cn
        ),
        in_specs=[vmem()] * 7,
        out_specs=(vmem(), vmem(), vmem()),
        scratch_shapes=[pltpu.VMEM((T, B, 4 * H), jnp.float32),
                        pltpu.VMEM((T, B, H), jnp.float32)],
    )(x, wih0_b, b0, whh0_b, wih1_b, whh1_b, b1)


# ---------------------------------------------------------------------------
# Parameter init (PyTorch layout) and kernel-side weight preparation
# ---------------------------------------------------------------------------
def init_encoder_params(key, input_size, nhidden, nlayers):
    """PyTorch init_weights(): every LSTM parameter ~ U(-0.1, 0.1).

    Raw PyTorch-layout params: w_ih (4H, fin), w_hh (4H, H), b_ih (4H,),
    b_hh (4H,), gate order (i, f, g, o).
    """
    params = []
    for layer in range(nlayers):
        fin = input_size if layer == 0 else nhidden
        key, k1, k2, k3, k4 = jax.random.split(key, 5)
        params.append({
            "w_ih": jax.random.uniform(k1, (4 * nhidden, fin), jnp.float32, -0.1, 0.1),
            "w_hh": jax.random.uniform(k2, (4 * nhidden, nhidden), jnp.float32, -0.1, 0.1),
            "b_ih": jax.random.uniform(k3, (4 * nhidden,), jnp.float32, -0.1, 0.1),
            "b_hh": jax.random.uniform(k4, (4 * nhidden,), jnp.float32, -0.1, 0.1),
        })
    return params


def _permute_gates(w):
    """Reorder last-dim gate blocks from PyTorch (i, f, g, o) to (i, f, o, g)."""
    H = w.shape[-1] // 4
    return jnp.concatenate([w[..., :2 * H], w[..., 3 * H:], w[..., 2 * H:3 * H]],
                           axis=-1)


def prepare_kernel_params(raw_params):
    """Transpose / gate-permute / cast the raw LSTM params for the fused kernel.

    Matmul weights go to bf16 (MXU operands); biases stay f32 (added on the
    f32 accumulated gates).
    """
    assert len(raw_params) == 2, "fused kernel is specialized to nlayers=2"
    p0, p1 = raw_params
    bf16 = lambda a: a.astype(jnp.bfloat16)
    return {
        "wih0_t": bf16(_permute_gates(p0["w_ih"].T)),                 # (F, 4H)
        "b0":     _permute_gates(p0["b_ih"] + p0["b_hh"])[None, :],   # (1, 4H)
        "whh0_t": bf16(_permute_gates(p0["w_hh"].T)),                 # (H, 4H)
        "wih1_t": bf16(_permute_gates(p1["w_ih"].T)),                 # (H, 4H)
        "whh1_t": bf16(_permute_gates(p1["w_hh"].T)),                 # (H, 4H)
        "b1":     _permute_gates(p1["b_ih"] + p1["b_hh"])[None, :],   # (1, 4H)
    }


# ---------------------------------------------------------------------------
# Forward pass (matches the PyTorch EncoderRNN.forward semantics)
# ---------------------------------------------------------------------------
@jax.jit
def encoder_rnn_forward(x, kp):
    B, T, F = x.shape
    output, hn, cn = _fused_encoder_pallas(
        x.astype(jnp.float32),
        kp["wih0_t"], kp["b0"], kp["whh0_t"],
        kp["wih1_t"], kp["whh1_t"], kp["b1"])
    # output is already (B, T, H) and already time-flipped (done in-kernel).

    # Post-processing glue (exactly as in the PyTorch forward):
    newinput = jnp.flip(x, axis=1)
    zeros = jnp.zeros((B, 1, F), dtype=x.dtype)
    newinput = jnp.concatenate((zeros, newinput), axis=1)[:, :-1, :]
    return output, (hn, cn), newinput


# ---------------------------------------------------------------------------
# Pure-JAX reference (lax.scan LSTM, PyTorch gate order) for correctness check
# ---------------------------------------------------------------------------
def _reference_encoder(x, raw_params):
    B, T, F = x.shape
    layer_in = x.astype(jnp.float32)
    hns, cns = [], []
    for p in raw_params:
        H = p["w_hh"].shape[1]
        wih_t = p["w_ih"].T
        whh_t = p["w_hh"].T
        b = (p["b_ih"] + p["b_hh"])[None, :]

        def step(carry, x_t, wih_t=wih_t, whh_t=whh_t, b=b, H=H):
            h, c = carry
            gates = x_t @ wih_t + h @ whh_t + b
            i = jax.nn.sigmoid(gates[:, 0 * H:1 * H])
            f = jax.nn.sigmoid(gates[:, 1 * H:2 * H])
            g = jnp.tanh(gates[:, 2 * H:3 * H])
            o = jax.nn.sigmoid(gates[:, 3 * H:4 * H])
            c = f * c + i * g
            h = o * jnp.tanh(c)
            return (h, c), h

        init = (jnp.zeros((B, H), jnp.float32), jnp.zeros((B, H), jnp.float32))
        (hn, cn), ys = lax.scan(step, init, jnp.transpose(layer_in, (1, 0, 2)))
        layer_in = jnp.transpose(ys, (1, 0, 2))
        hns.append(hn)
        cns.append(cn)
    output = jnp.flip(layer_in, axis=1)
    return output, (jnp.stack(hns), jnp.stack(cns))


if __name__ == "__main__":
    B, T, F, H, NLAYERS = 2, 8, 16, 32, 2

    key = jax.random.PRNGKey(0)
    key, kx = jax.random.split(key)
    x = jax.random.normal(kx, (B, T, F), dtype=jnp.float32)

    raw_params = init_encoder_params(key, F, H, NLAYERS)
    kparams = prepare_kernel_params(raw_params)

    output, (hn, cn), newinput = encoder_rnn_forward(x, kparams)
    jax.block_until_ready((output, hn, cn, newinput))

    # Correctness vs pure-JAX reference LSTM (PyTorch gate order / layout).
    # Tolerance loosened because kernel matmuls use bf16 MXU operands
    # (f32 accumulation); element-wise math stays f32.
    ref_out, (ref_hn, ref_cn) = _reference_encoder(x, raw_params)
    assert jnp.allclose(output, ref_out, atol=3e-2), "output mismatch"
    assert jnp.allclose(hn, ref_hn, atol=3e-2), "hn mismatch"
    assert jnp.allclose(cn, ref_cn, atol=3e-2), "cn mismatch"

    # newinput glue check: first step zero, rest = shifted flipped x.
    assert jnp.allclose(newinput[:, 0, :], jnp.zeros((B, F), x.dtype))
    assert jnp.allclose(newinput[:, 1:, :], jnp.flip(x, axis=1)[:, :-1, :])

    # Shape checks per PyTorch semantics.
    assert output.shape == (B, T, H)
    assert hn.shape == (NLAYERS, B, H) and cn.shape == (NLAYERS, B, H)
    assert newinput.shape == (B, T, F)

    print("KERNEL_OK")
</pallas_src>

<mosaic_0001>
module attributes {stable_mosaic.version = 11 : i64} {
  func.func @_fused_encoder_kernel(%arg0: memref<2x8x16xf32, #tpu.memory_space<vmem>>, %arg1: memref<16x128xbf16, #tpu.memory_space<vmem>>, %arg2: memref<1x128xf32, #tpu.memory_space<vmem>>, %arg3: memref<32x128xbf16, #tpu.memory_space<vmem>>, %arg4: memref<32x128xbf16, #tpu.memory_space<vmem>>, %arg5: memref<32x128xbf16, #tpu.memory_space<vmem>>, %arg6: memref<1x128xf32, #tpu.memory_space<vmem>>, %arg7: memref<2x8x32xf32, #tpu.memory_space<vmem>>, %arg8: memref<2x2x32xf32, #tpu.memory_space<vmem>>, %arg9: memref<2x2x32xf32, #tpu.memory_space<vmem>>, %arg10: memref<8x2x128xf32, #tpu.memory_space<vmem>>, %arg11: memref<8x2x32xf32, #tpu.memory_space<vmem>>) attributes {dimension_semantics = [], scalar_prefetch = 0 : i64, scratch_operands = 2 : i64, tpu.core_type = #tpu.core_type<tc>} {
    %c0 = arith.constant 0 : index
    %c0_0 = arith.constant 0 : index
    %c0_1 = arith.constant 0 : index
    %0 = vector.load %arg0[%c0, %c0_0, %c0_1] : memref<2x8x16xf32, #tpu.memory_space<vmem>>, vector<2x8x16xf32>
    %1 = tpu.transpose %0, [1, 0, 2] : vector<2x8x16xf32> -> vector<8x2x16xf32>
    %2 = vector.shape_cast %1 : vector<8x2x16xf32> to vector<16x16xf32>
    %3 = arith.truncf %2 : vector<16x16xf32> to vector<16x16xbf16>
    %c0_2 = arith.constant 0 : index
    %c0_3 = arith.constant 0 : index
    %4 = vector.load %arg1[%c0_2, %c0_3] : memref<16x128xbf16, #tpu.memory_space<vmem>>, vector<16x128xbf16>
    %cst = arith.constant dense<0.000000e+00> : vector<16x128xf32>
    %5 = tpu.matmul %3, %4, %cst {dimension_numbers = #tpu.dot_dimension_numbers<[1], [0], [0], [1], [0, 0, 1, 1], [], []>} : vector<16x16xbf16>, vector<16x128xbf16>, vector<16x128xf32> -> vector<16x128xf32>
    %c0_4 = arith.constant 0 : index
    %c0_5 = arith.constant 0 : index
    %6 = vector.load %arg2[%c0_4, %c0_5] : memref<1x128xf32, #tpu.memory_space<vmem>>, vector<1x128xf32>
    %7 = vector.broadcast %6 : vector<1x128xf32> to vector<16x128xf32>
    %8 = arith.addf %5, %7 : vector<16x128xf32>
    %9 = vector.shape_cast %8 : vector<16x128xf32> to vector<8x2x128xf32>
    %c0_6 = arith.constant 0 : index
    %c0_7 = arith.constant 0 : index
    %c0_8 = arith.constant 0 : index
    %10 = vector.load %arg10[%c0_6, %c0_7, %c0_8] : memref<8x2x128xf32, #tpu.memory_space<vmem>>, vector<8x2x128xf32>
    tpu.vector_store %arg10[%c0_6, %c0_7, %c0_8], %9 {strides = array<i32>} : memref<8x2x128xf32, #tpu.memory_space<vmem>>, vector<8x2x128xf32>,
    %c0_9 = arith.constant 0 : index
    %c0_10 = arith.constant 0 : index
    %11 = vector.load %arg3[%c0_9, %c0_10] : memref<32x128xbf16, #tpu.memory_space<vmem>>, vector<32x128xbf16>
    %c0_11 = arith.constant 0 : index
    %c0_12 = arith.constant 0 : index
    %12 = vector.load %arg4[%c0_11, %c0_12] : memref<32x128xbf16, #tpu.memory_space<vmem>>, vector<32x128xbf16>
    %c0_13 = arith.constant 0 : index
    %c0_14 = arith.constant 0 : index
    %13 = vector.load %arg5[%c0_13, %c0_14] : memref<32x128xbf16, #tpu.memory_space<vmem>>, vector<32x128xbf16>
    %c0_15 = arith.constant 0 : index
    %c0_16 = arith.constant 0 : index
    %14 = vector.load %arg6[%c0_15, %c0_16] : memref<1x128xf32, #tpu.memory_space<vmem>>, vector<1x128xf32>
    %15 = vector.shape_cast %14 : vector<1x128xf32> to vector<1x128xf32>
    %16 = vector.broadcast %15 : vector<1x128xf32> to vector<2x128xf32>
    %cst_17 = arith.constant 0.000000e+00 : f32
    %17 = vector.broadcast %cst_17 : f32 to vector<2x32xf32>
    %c0_i32 = arith.constant 0 : i32
    %18 = arith.index_cast %c0_i32 : i32 to index
    %c0_18 = arith.constant 0 : index
    %c0_19 = arith.constant 0 : index
    %19 = vector.load %arg10[%18, %c0_18, %c0_19] : memref<8x2x128xf32, #tpu.memory_space<vmem>>, vector<1x2x128xf32>
    %20 = vector.shape_cast %19 : vector<1x2x128xf32> to vector<2x128xf32>
    %21 = arith.truncf %17 : vector<2x32xf32> to vector<2x32xbf16>
    %cst_20 = arith.constant dense<0.000000e+00> : vector<2x128xf32>
    %22 = tpu.matmul %21, %11, %cst_20 {dimension_numbers = #tpu.dot_dimension_numbers<[1], [0], [0], [1], [0, 0, 1, 1], [], []>} : vector<2x32xbf16>, vector<32x128xbf16>, vector<2x128xf32> -> vector<2x128xf32>
    %23 = arith.addf %20, %22 : vector<2x128xf32>
    %24 = vector.extract_strided_slice %23 {offsets = [0, 0], sizes = [2, 96], strides = [1, 1]} : vector<2x128xf32> to vector<2x96xf32>
    %25 = arith.negf %24 : vector<2x96xf32>
    %26 = math.exp %25 : vector<2x96xf32>
    %cst_21 = arith.constant 1.000000e+00 : f32
    %27 = vector.broadcast %cst_21 : f32 to vector<2x96xf32>
    %28 = arith.addf %27, %26 : vector<2x96xf32>
    %29 = arith.divf %27, %28 : vector<2x96xf32>
    %30 = vector.extract_strided_slice %23 {offsets = [0, 96], sizes = [2, 32], strides = [1, 1]} : vector<2x128xf32> to vector<2x32xf32>
    %31 = math.tanh %30 : vector<2x32xf32>
    %32 = vector.extract_strided_slice %29 {offsets = [0, 0], sizes = [2, 32], strides = [1, 1]} : vector<2x96xf32> to vector<2x32xf32>
    %33 = vector.extract_strided_slice %29 {offsets = [0, 32], sizes = [2, 32], strides = [1, 1]} : vector<2x96xf32> to vector<2x32xf32>
    %34 = vector.extract_strided_slice %29 {offsets = [0, 64], sizes = [2, 32], strides = [1, 1]} : vector<2x96xf32> to vector<2x32xf32>
    %35 = arith.mulf %33, %17 : vector<2x32xf32>
    %36 = arith.mulf %32, %31 : vector<2x32xf32>
    %37 = arith.addf %35, %36 : vector<2x32xf32>
    %38 = math.tanh %37 : vector<2x32xf32>
    %39 = arith.mulf %34, %38 : vector<2x32xf32>
    %40 = arith.truncf %39 : vector<2x32xf32> to vector<2x32xbf16>
    %cst_22 = arith.constant dense<0.000000e+00> : vector<2x128xf32>
    %41 = tpu.matmul %40, %12, %cst_22 {dimension_numbers = #tpu.dot_dimension_numbers<[1], [0], [0], [1], [0, 0, 1, 1], [], []>} : vector<2x32xbf16>, vector<32x128xbf16>, vector<2x128xf32> -> vector<2x128xf32>
    %42 = arith.truncf %17 : vector<2x32xf32> to vector<2x32xbf16>
    %cst_23 = arith.constant dense<0.000000e+00> : vector<2x128xf32>
    %43 = tpu.matmul %42, %13, %cst_23 {dimension_numbers = #tpu.dot_dimension_numbers<[1], [0], [0], [1], [0, 0, 1, 1], [], []>} : vector<2x32xbf16>, vector<32x128xbf16>, vector<2x128xf32> -> vector<2x128xf32>
    %44 = arith.addf %41, %43 : vector<2x128xf32>
    %45 = arith.addf %44, %16 : vector<2x128xf32>
    %46 = vector.extract_strided_slice %45 {offsets = [0, 0], sizes = [2, 96], strides = [1, 1]} : vector<2x128xf32> to vector<2x96xf32>
    %47 = arith.negf %46 : vector<2x96xf32>
    %48 = math.exp %47 : vector<2x96xf32>
    %cst_24 = arith.constant 1.000000e+00 : f32
    %49 = vector.broadcast %cst_24 : f32 to vector<2x96xf32>
    %50 = arith.addf %49, %48 : vector<2x96xf32>
    %51 = arith.divf %49, %50 : vector<2x96xf32>
    %52 = vector.extract_strided_slice %45 {offsets = [0, 96], sizes = [2, 32], strides = [1, 1]} : vector<2x128xf32> to vector<2x32xf32>
    %53 = math.tanh %52 : vector<2x32xf32>
    %54 = vector.extract_strided_slice %51 {offsets = [0, 0], sizes = [2, 32], strides = [1, 1]} : vector<2x96xf32> to vector<2x32xf32>
    %55 = vector.extract_strided_slice %51 {offsets = [0, 32], sizes = [2, 32], strides = [1, 1]} : vector<2x96xf32> to vector<2x32xf32>
    %56 = vector.extract_strided_slice %51 {offsets = [0, 64], sizes = [2, 32], strides = [1, 1]} : vector<2x96xf32> to vector<2x32xf32>
    %57 = arith.mulf %55, %17 : vector<2x32xf32>
    %58 = arith.mulf %54, %53 : vector<2x32xf32>
    %59 = arith.addf %57, %58 : vector<2x32xf32>
    %60 = math.tanh %59 : vector<2x32xf32>
    %61 = arith.mulf %56, %60 : vector<2x32xf32>
    %c7_i32 = arith.constant 7 : i32
    %62 = arith.subi %c7_i32, %c0_i32 : i32
    %63 = arith.index_cast %62 : i32 to index
    %c0_25 = arith.constant 0 : index
    %c0_26 = arith.constant 0 : index
    %64 = vector.load %arg11[%63, %c0_25, %c0_26] : memref<8x2x32xf32, #tpu.memory_space<vmem>>, vector<1x2x32xf32>
    %65 = vector.shape_cast %64 : vector<1x2x32xf32> to vector<2x32xf32>
    %66 = vector.shape_cast %61 : vector<2x32xf32> to vector<1x2x32xf32>
    tpu.vector_store %arg11[%63, %c0_25, %c0_26], %66 {strides = array<i32>} : memref<8x2x32xf32, #tpu.memory_space<vmem>>, vector<1x2x32xf32>,
    %c1_i32 = arith.constant 1 : i32
    %67 = arith.index_cast %c1_i32 : i32 to index
    %c0_27 = arith.constant 0 : index
    %c0_28 = arith.constant 0 : index
    %68 = vector.load %arg10[%67, %c0_27, %c0_28] : memref<8x2x128xf32, #tpu.memory_space<vmem>>, vector<1x2x128xf32>
    %69 = vector.shape_cast %68 : vector<1x2x128xf32> to vector<2x128xf32>
    %70 = arith.truncf %39 : vector<2x32xf32> to vector<2x32xbf16>
    %cst_29 = arith.constant dense<0.000000e+00> : vector<2x128xf32>
    %71 = tpu.matmul %70, %11, %cst_29 {dimension_numbers = #tpu.dot_dimension_numbers<[1], [0], [0], [1], [0, 0, 1, 1], [], []>} : vector<2x32xbf16>, vector<32x128xbf16>, vector<2x128xf32> -> vector<2x128xf32>
    %72 = arith.addf %69, %71 : vector<2x128xf32>
    %73 = vector.extract_strided_slice %72 {offsets = [0, 0], sizes = [2, 96], strides = [1, 1]} : vector<2x128xf32> to vector<2x96xf32>
    %74 = arith.negf %73 : vector<2x96xf32>
    %75 = math.exp %74 : vector<2x96xf32>
    %cst_30 = arith.constant 1.000000e+00 : f32
    %76 = vector.broadcast %cst_30 : f32 to vector<2x96xf32>
    %77 = arith.addf %76, %75 : vector<2x96xf32>
    %78 = arith.divf %76, %77 : vector<2x96xf32>
    %79 = vector.extract_strided_slice %72 {offsets = [0, 96], sizes = [2, 32], strides = [1, 1]} : vector<2x128xf32> to vector<2x32xf32>
    %80 = math.tanh %79 : vector<2x32xf32>
    %81 = vector.extract_strided_slice %78 {offsets = [0, 0], sizes = [2, 32], strides = [1, 1]} : vector<2x96xf32> to vector<2x32xf32>
    %82 = vector.extract_strided_slice %78 {offsets = [0, 32], sizes = [2, 32], strides = [1, 1]} : vector<2x96xf32> to vector<2x32xf32>
    %83 = vector.extract_strided_slice %78 {offsets = [0, 64], sizes = [2, 32], strides = [1, 1]} : vector<2x96xf32> to vector<2x32xf32>
    %84 = arith.mulf %82, %37 : vector<2x32xf32>
    %85 = arith.mulf %81, %80 : vector<2x32xf32>
    %86 = arith.addf %84, %85 : vector<2x32xf32>
    %87 = math.tanh %86 : vector<2x32xf32>
    %88 = arith.mulf %83, %87 : vector<2x32xf32>
    %89 = arith.truncf %88 : vector<2x32xf32> to vector<2x32xbf16>
    %cst_31 = arith.constant dense<0.000000e+00> : vector<2x128xf32>
    %90 = tpu.matmul %89, %12, %cst_31 {dimension_numbers = #tpu.dot_dimension_numbers<[1], [0], [0], [1], [0, 0, 1, 1], [], []>} : vector<2x32xbf16>, vector<32x128xbf16>, vector<2x128xf32> -> vector<2x128xf32>
    %91 = arith.truncf %61 : vector<2x32xf32> to vector<2x32xbf16>
    %cst_32 = arith.constant dense<0.000000e+00> : vector<2x128xf32>
    %92 = tpu.matmul %91, %13, %cst_32 {dimension_numbers = #tpu.dot_dimension_numbers<[1], [0], [0], [1], [0, 0, 1, 1], [], []>} : vector<2x32xbf16>, vector<32x128xbf16>, vector<2x128xf32> -> vector<2x128xf32>
    %93 = arith.addf %90, %92 : vector<2x128xf32>
    %94 = arith.addf %93, %16 : vector<2x128xf32>
    %95 = vector.extract_strided_slice %94 {offsets = [0, 0], sizes = [2, 96], strides = [1, 1]} : vector<2x128xf32> to vector<2x96xf32>
    %96 = arith.negf %95 : vector<2x96xf32>
    %97 = math.exp %96 : vector<2x96xf32>
    %cst_33 = arith.constant 1.000000e+00 : f32
    %98 = vector.broadcast %cst_33 : f32 to vector<2x96xf32>
    %99 = arith.addf %98, %97 : vector<2x96xf32>
    %100 = arith.divf %98, %99 : vector<2x96xf32>
    %101 = vector.extract_strided_slice %94 {offsets = [0, 96], sizes = [2, 32], strides = [1, 1]} : vector<2x128xf32> to vector<2x32xf32>
    %102 = math.tanh %101 : vector<2x32xf32>
    %103 = vector.extract_strided_slice %100 {offsets = [0, 0], sizes = [2, 32], strides = [1, 1]} : vector<2x96xf32> to vector<2x32xf32>
    %104 = vector.extract_strided_slice %100 {offsets = [0, 32], sizes = [2, 32], strides = [1, 1]} : vector<2x96xf32> to vector<2x32xf32>
    %105 = vector.extract_strided_slice %100 {offsets = [0, 64], sizes = [2, 32], strides = [1, 1]} : vector<2x96xf32> to vector<2x32xf32>
    %106 = arith.mulf %104, %59 : vector<2x32xf32>
    %107 = arith.mulf %103, %102 : vector<2x32xf32>
    %108 = arith.addf %106, %107 : vector<2x32xf32>
    %109 = math.tanh %108 : vector<2x32xf32>
    %110 = arith.mulf %105, %109 : vector<2x32xf32>
    %c7_i32_34 = arith.constant 7 : i32
    %111 = arith.subi %c7_i32_34, %c1_i32 : i32
    %112 = arith.index_cast %111 : i32 to index
    %c0_35 = arith.constant 0 : index
    %c0_36 = arith.constant 0 : index
    %113 = vector.load %arg11[%112, %c0_35, %c0_36] : memref<8x2x32xf32, #tpu.memory_space<vmem>>, vector<1x2x32xf32>
    %114 = vector.shape_cast %113 : vector<1x2x32xf32> to vector<2x32xf32>
    %115 = vector.shape_cast %110 : vector<2x32xf32> to vector<1x2x32xf32>
    tpu.vector_store %arg11[%112, %c0_35, %c0_36], %115 {strides = array<i32>} : memref<8x2x32xf32, #tpu.memory_space<vmem>>, vector<1x2x32xf32>,
    %c2_i32 = arith.constant 2 : i32
    %116 = arith.index_cast %c2_i32 : i32 to index
    %c0_37 = arith.constant 0 : index
    %c0_38 = arith.constant 0 : index
    %117 = vector.load %arg10[%116, %c0_37, %c0_38] : memref<8x2x128xf32, #tpu.memory_space<vmem>>, vector<1x2x128xf32>
    %118 = vector.shape_cast %117 : vector<1x2x128xf32> to vector<2x128xf32>
    %119 = arith.truncf %88 : vector<2x32xf32> to vector<2x32xbf16>
    %cst_39 = arith.constant dense<0.000000e+00> : vector<2x128xf32>
    %120 = tpu.matmul %119, %11, %cst_39 {dimension_numbers = #tpu.dot_dimension_numbers<[1], [0], [0], [1], [0, 0, 1, 1], [], []>} : vector<2x32xbf16>, vector<32x128xbf16>, vector<2x128xf32> -> vector<2x128xf32>
    %121 = arith.addf %118, %120 : vector<2x128xf32>
    %122 = vector.extract_strided_slice %121 {offsets = [0, 0], sizes = [2, 96], strides = [1, 1]} : vector<2x128xf32> to vector<2x96xf32>
    %123 = arith.negf %122 : vector<2x96xf32>
    %124 = math.exp %123 : vector<2x96xf32>
    %cst_40 = arith.constant 1.000000e+00 : f32
    %125 = vector.broadcast %cst_40 : f32 to vector<2x96xf32>
    %126 = arith.addf %125, %124 : vector<2x96xf32>
    %127 = arith.divf %125, %126 : vector<2x96xf32>
    %128 = vector.extract_strided_slice %121 {offsets = [0, 96], sizes = [2, 32], strides = [1, 1]} : vector<2x128xf32> to vector<2x32xf32>
    %129 = math.tanh %128 : vector<2x32xf32>
    %130 = vector.extract_strided_slice %127 {offsets = [0, 0], sizes = [2, 32], strides = [1, 1]} : vector<2x96xf32> to vector<2x32xf32>
    %131 = vector.extract_strided_slice %127 {offsets = [0, 32], sizes = [2, 32], strides = [1, 1]} : vector<2x96xf32> to vector<2x32xf32>
    %132 = vector.extract_strided_slice %127 {offsets = [0, 64], sizes = [2, 32], strides = [1, 1]} : vector<2x96xf32> to vector<2x32xf32>
    %133 = arith.mulf %131, %86 : vector<2x32xf32>
    %134 = arith.mulf %130, %129 : vector<2x32xf32>
    %135 = arith.addf %133, %134 : vector<2x32xf32>
    %136 = math.tanh %135 : vector<2x32xf32>
    %137 = arith.mulf %132, %136 : vector<2x32xf32>
    %138 = arith.truncf %137 : vector<2x32xf32> to vector<2x32xbf16>
    %cst_41 = arith.constant dense<0.000000e+00> : vector<2x128xf32>
    %139 = tpu.matmul %138, %12, %cst_41 {dimension_numbers = #tpu.dot_dimension_numbers<[1], [0], [0], [1], [0, 0, 1, 1], [], []>} : vector<2x32xbf16>, vector<32x128xbf16>, vector<2x128xf32> -> vector<2x128xf32>
    %140 = arith.truncf %110 : vector<2x32xf32> to vector<2x32xbf16>
    %cst_42 = arith.constant dense<0.000000e+00> : vector<2x128xf32>
    %141 = tpu.matmul %140, %13, %cst_42 {dimension_numbers = #tpu.dot_dimension_numbers<[1], [0], [0], [1], [0, 0, 1, 1], [], []>} : vector<2x32xbf16>, vector<32x128xbf16>, vector<2x128xf32> -> vector<2x128xf32>
    %142 = arith.addf %139, %141 : vector<2x128xf32>
    %143 = arith.addf %142, %16 : vector<2x128xf32>
    %144 = vector.extract_strided_slice %143 {offsets = [0, 0], sizes = [2, 96], strides = [1, 1]} : vector<2x128xf32> to vector<2x96xf32>
    %145 = arith.negf %144 : vector<2x96xf32>
    %146 = math.exp %145 : vector<2x96xf32>
    %cst_43 = arith.constant 1.000000e+00 : f32
    %147 = vector.broadcast %cst_43 : f32 to vector<2x96xf32>
    %148 = arith.addf %147, %146 : vector<2x96xf32>
    %149 = arith.divf %147, %148 : vector<2x96xf32>
    %150 = vector.extract_strided_slice %143 {offsets = [0, 96], sizes = [2, 32], strides = [1, 1]} : vector<2x128xf32> to vector<2x32xf32>
    %151 = math.tanh %150 : vector<2x32xf32>
    %152 = vector.extract_strided_slice %149 {offsets = [0, 0], sizes = [2, 32], strides = [1, 1]} : vector<2x96xf32> to vector<2x32xf32>
    %153 = vector.extract_strided_slice %149 {offsets = [0, 32], sizes = [2, 32], strides = [1, 1]} : vector<2x96xf32> to vector<2x32xf32>
    %154 = vector.extract_strided_slice %149 {offsets = [0, 64], sizes = [2, 32], strides = [1, 1]} : vector<2x96xf32> to vector<2x32xf32>
    %155 = arith.mulf %153, %108 : vector<2x32xf32>
    %156 = arith.mulf %152, %151 : vector<2x32xf32>
    %157 = arith.addf %155, %156 : vector<2x32xf32>
    %158 = math.tanh %157 : vector<2x32xf32>
    %159 = arith.mulf %154, %158 : vector<2x32xf32>
    %c7_i32_44 = arith.constant 7 : i32
    %160 = arith.subi %c7_i32_44, %c2_i32 : i32
    %161 = arith.index_cast %160 : i32 to index
    %c0_45 = arith.constant 0 : index
    %c0_46 = arith.constant 0 : index
    %162 = vector.load %arg11[%161, %c0_45, %c0_46] : memref<8x2x32xf32, #tpu.memory_space<vmem>>, vector<1x2x32xf32>
    %163 = vector.shape_cast %162 : vector<1x2x32xf32> to vector<2x32xf32>
    %164 = vector.shape_cast %159 : vector<2x32xf32> to vector<1x2x32xf32>
    tpu.vector_store %arg11[%161, %c0_45, %c0_46], %164 {strides = array<i32>} : memref<8x2x32xf32, #tpu.memory_space<vmem>>, vector<1x2x32xf32>,
    %c3_i32 = arith.constant 3 : i32
    %165 = arith.index_cast %c3_i32 : i32 to index
    %c0_47 = arith.constant 0 : index
    %c0_48 = arith.constant 0 : index
    %166 = vector.load %arg10[%165, %c0_47, %c0_48] : memref<8x2x128xf32, #tpu.memory_space<vmem>>, vector<1x2x128xf32>
    %167 = vector.shape_cast %166 : vector<1x2x128xf32> to vector<2x128xf32>
    %168 = arith.truncf %137 : vector<2x32xf32> to vector<2x32xbf16>
    %cst_49 = arith.constant dense<0.000000e+00> : vector<2x128xf32>
    %169 = tpu.matmul %168, %11, %cst_49 {dimension_numbers = #tpu.dot_dimension_numbers<[1], [0], [0], [1], [0, 0, 1, 1], [], []>} : vector<2x32xbf16>, vector<32x128xbf16>, vector<2x128xf32> -> vector<2x128xf32>
    %170 = arith.addf %167, %169 : vector<2x128xf32>
    %171 = vector.extract_strided_slice %170 {offsets = [0, 0], sizes = [2, 96], strides = [1, 1]} : vector<2x128xf32> to vector<2x96xf32>
    %172 = arith.negf %171 : vector<2x96xf32>
    %173 = math.exp %172 : vector<2x96xf32>
    %cst_50 = arith.constant 1.000000e+00 : f32
    %174 = vector.broadcast %cst_50 : f32 to vector<2x96xf32>
    %175 = arith.addf %174, %173 : vector<2x96xf32>
    %176 = arith.divf %174, %175 : vector<2x96xf32>
    %177 = vector.extract_strided_slice %170 {offsets = [0, 96], sizes = [2, 32], strides = [1, 1]} : vector<2x128xf32> to vector<2x32xf32>
    %178 = math.tanh %177 : vector<2x32xf32>
    %179 = vector.extract_strided_slice %176 {offsets = [0, 0], sizes = [2, 32], strides = [1, 1]} : vector<2x96xf32> to vector<2x32xf32>
    %180 = vector.extract_strided_slice %176 {offsets = [0, 32], sizes = [2, 32], strides = [1, 1]} : vector<2x96xf32> to vector<2x32xf32>
    %181 = vector.extract_strided_slice %176 {offsets = [0, 64], sizes = [2, 32], strides = [1, 1]} : vector<2x96xf32> to vector<2x32xf32>
    %182 = arith.mulf %180, %135 : vector<2x32xf32>
    %183 = arith.mulf %179, %178 : vector<2x32xf32>
    %184 = arith.addf %182, %183 : vector<2x32xf32>
    %185 = math.tanh %184 : vector<2x32xf32>
    %186 = arith.mulf %181, %185 : vector<2x32xf32>
    %187 = arith.truncf %186 : vector<2x32xf32> to vector<2x32xbf16>
    %cst_51 = arith.constant dense<0.000000e+00> : vector<2x128xf32>
    %188 = tpu.matmul %187, %12, %cst_51 {dimension_numbers = #tpu.dot_dimension_numbers<[1], [0], [0], [1], [0, 0, 1, 1], [], []>} : vector<2x32xbf16>, vector<32x128xbf16>, vector<2x128xf32> -> vector<2x128xf32>
    %189 = arith.truncf %159 : vector<2x32xf32> to vector<2x32xbf16>
    %cst_52 = arith.constant dense<0.000000e+00> : vector<2x128xf32>
    %190 = tpu.matmul %189, %13, %cst_52 {dimension_numbers = #tpu.dot_dimension_numbers<[1], [0], [0], [1], [0, 0, 1, 1], [], []>} : vector<2x32xbf16>, vector<32x128xbf16>, vector<2x128xf32> -> vector<2x128xf32>
    %191 = arith.addf %188, %190 : vector<2x128xf32>
    %192 = arith.addf %191, %16 : vector<2x128xf32>
    %193 = vector.extract_strided_slice %192 {offsets = [0, 0], sizes = [2, 96], strides = [1, 1]} : vector<2x128xf32> to vector<2x96xf32>
    %194 = arith.negf %193 : vector<2x96xf32>
    %195 = math.exp %194 : vector<2x96xf32>
    %cst_53 = arith.constant 1.000000e+00 : f32
    %196 = vector.broadcast %cst_53 : f32 to vector<2x96xf32>
    %197 = arith.addf %196, %195 : vector<2x96xf32>
    %198 = arith.divf %196, %197 : vector<2x96xf32>
    %199 = vector.extract_strided_slice %192 {offsets = [0, 96], sizes = [2, 32], strides = [1, 1]} : vector<2x128xf32> to vector<2x32xf32>
    %200 = math.tanh %199 : vector<2x32xf32>
    %201 = vector.extract_strided_slice %198 {offsets = [0, 0], sizes = [2, 32], strides = [1, 1]} : vector<2x96xf32> to vector<2x32xf32>
    %202 = vector.extract_strided_slice %198 {offsets = [0, 32], sizes = [2, 32], strides = [1, 1]} : vector<2x96xf32> to vector<2x32xf32>
    %203 = vector.extract_strided_slice %198 {offsets = [0, 64], sizes = [2, 32], strides = [1, 1]} : vector<2x96xf32> to vector<2x32xf32>
    %204 = arith.mulf %202, %157 : vector<2x32xf32>
    %205 = arith.mulf %201, %200 : vector<2x32xf32>
    %206 = arith.addf %204, %205 : vector<2x32xf32>
    %207 = math.tanh %206 : vector<2x32xf32>
    %208 = arith.mulf %203, %207 : vector<2x32xf32>
    %c7_i32_54 = arith.constant 7 : i32
    %209 = arith.subi %c7_i32_54, %c3_i32 : i32
    %210 = arith.index_cast %209 : i32 to index
    %c0_55 = arith.constant 0 : index
    %c0_56 = arith.constant 0 : index
    %211 = vector.load %arg11[%210, %c0_55, %c0_56] : memref<8x2x32xf32, #tpu.memory_space<vmem>>, vector<1x2x32xf32>
    %212 = vector.shape_cast %211 : vector<1x2x32xf32> to vector<2x32xf32>
    %213 = vector.shape_cast %208 : vector<2x32xf32> to vector<1x2x32xf32>
    tpu.vector_store %arg11[%210, %c0_55, %c0_56], %213 {strides = array<i32>} : memref<8x2x32xf32, #tpu.memory_space<vmem>>, vector<1x2x32xf32>,
    %c4_i32 = arith.constant 4 : i32
    %214 = arith.index_cast %c4_i32 : i32 to index
    %c0_57 = arith.constant 0 : index
    %c0_58 = arith.constant 0 : index
    %215 = vector.load %arg10[%214, %c0_57, %c0_58] : memref<8x2x128xf32, #tpu.memory_space<vmem>>, vector<1x2x128xf32>
    %216 = vector.shape_cast %215 : vector<1x2x128xf32> to vector<2x128xf32>
    %217 = arith.truncf %186 : vector<2x32xf32> to vector<2x32xbf16>
    %cst_59 = arith.constant dense<0.000000e+00> : vector<2x128xf32>
    %218 = tpu.matmul %217, %11, %cst_59 {dimension_numbers = #tpu.dot_dimension_numbers<[1], [0], [0], [1], [0, 0, 1, 1], [], []>} : vector<2x32xbf16>, vector<32x128xbf16>, vector<2x128xf32> -> vector<2x128xf32>
    %219 = arith.addf %216, %218 : vector<2x128xf32>
    %220 = vector.extract_strided_slice %219 {offsets = [0, 0], sizes = [2, 96], strides = [1, 1]} : vector<2x128xf32> to vector<2x96xf32>
    %221 = arith.negf %220 : vector<2x96xf32>
    %222 = math.exp %221 : vector<2x96xf32>
    %cst_60 = arith.constant 1.000000e+00 : f32
    %223 = vector.broadcast %cst_60 : f32 to vector<2x96xf32>
    %224 = arith.addf %223, %222 : vector<2x96xf32>
    %225 = arith.divf %223, %224 : vector<2x96xf32>
    %226 = vector.extract_strided_slice %219 {offsets = [0, 96], sizes = [2, 32], strides = [1, 1]} : vector<2x128xf32> to vector<2x32xf32>
    %227 = math.tanh %226 : vector<2x32xf32>
    %228 = vector.extract_strided_slice %225 {offsets = [0, 0], sizes = [2, 32], strides = [1, 1]} : vector<2x96xf32> to vector<2x32xf32>
    %229 = vector.extract_strided_slice %225 {offsets = [0, 32], sizes = [2, 32], strides = [1, 1]} : vector<2x96xf32> to vector<2x32xf32>
    %230 = vector.extract_strided_slice %225 {offsets = [0, 64], sizes = [2, 32], strides = [1, 1]} : vector<2x96xf32> to vector<2x32xf32>
    %231 = arith.mulf %229, %184 : vector<2x32xf32>
    %232 = arith.mulf %228, %227 : vector<2x32xf32>
    %233 = arith.addf %231, %232 : vector<2x32xf32>
    %234 = math.tanh %233 : vector<2x32xf32>
    %235 = arith.mulf %230, %234 : vector<2x32xf32>
    %236 = arith.truncf %235 : vector<2x32xf32> to vector<2x32xbf16>
    %cst_61 = arith.constant dense<0.000000e+00> : vector<2x128xf32>
    %237 = tpu.matmul %236, %12, %cst_61 {dimension_numbers = #tpu.dot_dimension_numbers<[1], [0], [0], [1], [0, 0, 1, 1], [], []>} : vector<2x32xbf16>, vector<32x128xbf16>, vector<2x128xf32> -> vector<2x128xf32>
    %238 = arith.truncf %208 : vector<2x32xf32> to vector<2x32xbf16>
    %cst_62 = arith.constant dense<0.000000e+00> : vector<2x128xf32>
    %239 = tpu.matmul %238, %13, %cst_62 {dimension_numbers = #tpu.dot_dimension_numbers<[1], [0], [0], [1], [0, 0, 1, 1], [], []>} : vector<2x32xbf16>, vector<32x128xbf16>, vector<2x128xf32> -> vector<2x128xf32>
    %240 = arith.addf %237, %239 : vector<2x128xf32>
    %241 = arith.addf %240, %16 : vector<2x128xf32>
    %242 = vector.extract_strided_slice %241 {offsets = [0, 0], sizes = [2, 96], strides = [1, 1]} : vector<2x128xf32> to vector<2x96xf32>
    %243 = arith.negf %242 : vector<2x96xf32>
    %244 = math.exp %243 : vector<2x96xf32>
    %cst_63 = arith.constant 1.000000e+00 : f32
    %245 = vector.broadcast %cst_63 : f32 to vector<2x96xf32>
    %246 = arith.addf %245, %244 : vector<2x96xf32>
    %247 = arith.divf %245, %246 : vector<2x96xf32>
    %248 = vector.extract_strided_slice %241 {offsets = [0, 96], sizes = [2, 32], strides = [1, 1]} : vector<2x128xf32> to vector<2x32xf32>
    %249 = math.tanh %248 : vector<2x32xf32>
    %250 = vector.extract_strided_slice %247 {offsets = [0, 0], sizes = [2, 32], strides = [1, 1]} : vector<2x96xf32> to vector<2x32xf32>
    %251 = vector.extract_strided_slice %247 {offsets = [0, 32], sizes = [2, 32], strides = [1, 1]} : vector<2x96xf32> to vector<2x32xf32>
    %252 = vector.extract_strided_slice %247 {offsets = [0, 64], sizes = [2, 32], strides = [1, 1]} : vector<2x96xf32> to vector<2x32xf32>
    %253 = arith.mulf %251, %206 : vector<2x32xf32>
    %254 = arith.mulf %250, %249 : vector<2x32xf32>
    %255 = arith.addf %253, %254 : vector<2x32xf32>
    %256 = math.tanh %255 : vector<2x32xf32>
    %257 = arith.mulf %252, %256 : vector<2x32xf32>
    %c7_i32_64 = arith.constant 7 : i32
    %258 = arith.subi %c7_i32_64, %c4_i32 : i32
    %259 = arith.index_cast %258 : i32 to index
    %c0_65 = arith.constant 0 : index
    %c0_66 = arith.constant 0 : index
    %260 = vector.load %arg11[%259, %c0_65, %c0_66] : memref<8x2x32xf32, #tpu.memory_space<vmem>>, vector<1x2x32xf32>
    %261 = vector.shape_cast %260 : vector<1x2x32xf32> to vector<2x32xf32>
    %262 = vector.shape_cast %257 : vector<2x32xf32> to vector<1x2x32xf32>
    tpu.vector_store %arg11[%259, %c0_65, %c0_66], %262 {strides = array<i32>} : memref<8x2x32xf32, #tpu.memory_space<vmem>>, vector<1x2x32xf32>,
    %c5_i32 = arith.constant 5 : i32
    %263 = arith.index_cast %c5_i32 : i32 to index
    %c0_67 = arith.constant 0 : index
    %c0_68 = arith.constant 0 : index
    %264 = vector.load %arg10[%263, %c0_67, %c0_68] : memref<8x2x128xf32, #tpu.memory_space<vmem>>, vector<1x2x128xf32>
    %265 = vector.shape_cast %264 : vector<1x2x128xf32> to vector<2x128xf32>
    %266 = arith.truncf %235 : vector<2x32xf32> to vector<2x32xbf16>
    %cst_69 = arith.constant dense<0.000000e+00> : vector<2x128xf32>
    %267 = tpu.matmul %266, %11, %cst_69 {dimension_numbers = #tpu.dot_dimension_numbers<[1], [0], [0], [1], [0, 0, 1, 1], [], []>} : vector<2x32xbf16>, vector<32x128xbf16>, vector<2x128xf32> -> vector<2x128xf32>
    %268 = arith.addf %265, %267 : vector<2x128xf32>
    %269 = vector.extract_strided_slice %268 {offsets = [0, 0], sizes = [2, 96], strides = [1, 1]} : vector<2x128xf32> to vector<2x96xf32>
    %270 = arith.negf %269 : vector<2x96xf32>
    %271 = math.exp %270 : vector<2x96xf32>
    %cst_70 = arith.constant 1.000000e+00 : f32
    %272 = vector.broadcast %cst_70 : f32 to vector<2x96xf32>
    %273 = arith.addf %272, %271 : vector<2x96xf32>
    %274 = arith.divf %272, %273 : vector<2x96xf32>
    %275 = vector.extract_strided_slice %268 {offsets = [0, 96], sizes = [2, 32], strides = [1, 1]} : vector<2x128xf32> to vector<2x32xf32>
    %276 = math.tanh %275 : vector<2x32xf32>
    %277 = vector.extract_strided_slice %274 {offsets = [0, 0], sizes = [2, 32], strides = [1, 1]} : vector<2x96xf32> to vector<2x32xf32>
    %278 = vector.extract_strided_slice %274 {offsets = [0, 32], sizes = [2, 32], strides = [1, 1]} : vector<2x96xf32> to vector<2x32xf32>
    %279 = vector.extract_strided_slice %274 {offsets = [0, 64], sizes = [2, 32], strides = [1, 1]} : vector<2x96xf32> to vector<2x32xf32>
    %280 = arith.mulf %278, %233 : vector<2x32xf32>
    %281 = arith.mulf %277, %276 : vector<2x32xf32>
    %282 = arith.addf %280, %281 : vector<2x32xf32>
    %283 = math.tanh %282 : vector<2x32xf32>
    %284 = arith.mulf %279, %283 : vector<2x32xf32>
    %285 = arith.truncf %284 : vector<2x32xf32> to vector<2x32xbf16>
    %cst_71 = arith.constant dense<0.000000e+00> : vector<2x128xf32>
    %286 = tpu.matmul %285, %12, %cst_71 {dimension_numbers = #tpu.dot_dimension_numbers<[1], [0], [0], [1], [0, 0, 1, 1], [], []>} : vector<2x32xbf16>, vector<32x128xbf16>, vector<2x128xf32> -> vector<2x128xf32>
    %287 = arith.truncf %257 : vector<2x32xf32> to vector<2x32xbf16>
    %cst_72 = arith.constant dense<0.000000e+00> : vector<2x128xf32>
    %288 = tpu.matmul %287, %13, %cst_72 {dimension_numbers = #tpu.dot_dimension_numbers<[1], [0], [0], [1], [0, 0, 1, 1], [], []>} : vector<2x32xbf16>, vector<32x128xbf16>, vector<2x128xf32> -> vector<2x128xf32>
    %289 = arith.addf %286, %288 : vector<2x128xf32>
    %290 = arith.addf %289, %16 : vector<2x128xf32>
    %291 = vector.extract_strided_slice %290 {offsets = [0, 0], sizes = [2, 96], strides = [1, 1]} : vector<2x128xf32> to vector<2x96xf32>
    %292 = arith.negf %291 : vector<2x96xf32>
    %293 = math.exp %292 : vector<2x96xf32>
    %cst_73 = arith.constant 1.000000e+00 : f32
    %294 = vector.broadcast %cst_73 : f32 to vector<2x96xf32>
    %295 = arith.addf %294, %293 : vector<2x96xf32>
    %296 = arith.divf %294, %295 : vector<2x96xf32>
    %297 = vector.extract_strided_slice %290 {offsets = [0, 96], sizes = [2, 32], strides = [1, 1]} : vector<2x128xf32> to vector<2x32xf32>
    %298 = math.tanh %297 : vector<2x32xf32>
    %299 = vector.extract_strided_slice %296 {offsets = [0, 0], sizes = [2, 32], strides = [1, 1]} : vector<2x96xf32> to vector<2x32xf32>
    %300 = vector.extract_strided_slice %296 {offsets = [0, 32], sizes = [2, 32], strides = [1, 1]} : vector<2x96xf32> to vector<2x32xf32>
    %301 = vector.extract_strided_slice %296 {offsets = [0, 64], sizes = [2, 32], strides = [1, 1]} : vector<2x96xf32> to vector<2x32xf32>
    %302 = arith.mulf %300, %255 : vector<2x32xf32>
    %303 = arith.mulf %299, %298 : vector<2x32xf32>
    %304 = arith.addf %302, %303 : vector<2x32xf32>
    %305 = math.tanh %304 : vector<2x32xf32>
    %306 = arith.mulf %301, %305 : vector<2x32xf32>
    %c7_i32_74 = arith.constant 7 : i32
    %307 = arith.subi %c7_i32_74, %c5_i32 : i32
    %308 = arith.index_cast %307 : i32 to index
    %c0_75 = arith.constant 0 : index
    %c0_76 = arith.constant 0 : index
    %309 = vector.load %arg11[%308, %c0_75, %c0_76] : memref<8x2x32xf32, #tpu.memory_space<vmem>>, vector<1x2x32xf32>
    %310 = vector.shape_cast %309 : vector<1x2x32xf32> to vector<2x32xf32>
    %311 = vector.shape_cast %306 : vector<2x32xf32> to vector<1x2x32xf32>
    tpu.vector_store %arg11[%308, %c0_75, %c0_76], %311 {strides = array<i32>} : memref<8x2x32xf32, #tpu.memory_space<vmem>>, vector<1x2x32xf32>,
    %c6_i32 = arith.constant 6 : i32
    %312 = arith.index_cast %c6_i32 : i32 to index
    %c0_77 = arith.constant 0 : index
    %c0_78 = arith.constant 0 : index
    %313 = vector.load %arg10[%312, %c0_77, %c0_78] : memref<8x2x128xf32, #tpu.memory_space<vmem>>, vector<1x2x128xf32>
    %314 = vector.shape_cast %313 : vector<1x2x128xf32> to vector<2x128xf32>
    %315 = arith.truncf %284 : vector<2x32xf32> to vector<2x32xbf16>
    %cst_79 = arith.constant dense<0.000000e+00> : vector<2x128xf32>
    %316 = tpu.matmul %315, %11, %cst_79 {dimension_numbers = #tpu.dot_dimension_numbers<[1], [0], [0], [1], [0, 0, 1, 1], [], []>} : vector<2x32xbf16>, vector<32x128xbf16>, vector<2x128xf32> -> vector<2x128xf32>
    %317 = arith.addf %314, %316 : vector<2x128xf32>
    %318 = vector.extract_strided_slice %317 {offsets = [0, 0], sizes = [2, 96], strides = [1, 1]} : vector<2x128xf32> to vector<2x96xf32>
    %319 = arith.negf %318 : vector<2x96xf32>
    %320 = math.exp %319 : vector<2x96xf32>
    %cst_80 = arith.constant 1.000000e+00 : f32
    %321 = vector.broadcast %cst_80 : f32 to vector<2x96xf32>
    %322 = arith.addf %321, %320 : vector<2x96xf32>
    %323 = arith.divf %321, %322 : vector<2x96xf32>
    %324 = vector.extract_strided_slice %317 {offsets = [0, 96], sizes = [2, 32], strides = [1, 1]} : vector<2x128xf32> to vector<2x32xf32>
    %325 = math.tanh %324 : vector<2x32xf32>
    %326 = vector.extract_strided_slice %323 {offsets = [0, 0], sizes = [2, 32], strides = [1, 1]} : vector<2x96xf32> to vector<2x32xf32>
    %327 = vector.extract_strided_slice %323 {offsets = [0, 32], sizes = [2, 32], strides = [1, 1]} : vector<2x96xf32> to vector<2x32xf32>
    %328 = vector.extract_strided_slice %323 {offsets = [0, 64], sizes = [2, 32], strides = [1, 1]} : vector<2x96xf32> to vector<2x32xf32>
    %329 = arith.mulf %327, %282 : vector<2x32xf32>
    %330 = arith.mulf %326, %325 : vector<2x32xf32>
    %331 = arith.addf %329, %330 : vector<2x32xf32>
    %332 = math.tanh %331 : vector<2x32xf32>
    %333 = arith.mulf %328, %332 : vector<2x32xf32>
    %334 = arith.truncf %333 : vector<2x32xf32> to vector<2x32xbf16>
    %cst_81 = arith.constant dense<0.000000e+00> : vector<2x128xf32>
    %335 = tpu.matmul %334, %12, %cst_81 {dimension_numbers = #tpu.dot_dimension_numbers<[1], [0], [0], [1], [0, 0, 1, 1], [], []>} : vector<2x32xbf16>, vector<32x128xbf16>, vector<2x128xf32> -> vector<2x128xf32>
    %336 = arith.truncf %306 : vector<2x32xf32> to vector<2x32xbf16>
    %cst_82 = arith.constant dense<0.000000e+00> : vector<2x128xf32>
    %337 = tpu.matmul %336, %13, %cst_82 {dimension_numbers = #tpu.dot_dimension_numbers<[1], [0], [0], [1], [0, 0, 1, 1], [], []>} : vector<2x32xbf16>, vector<32x128xbf16>, vector<2x128xf32> -> vector<2x128xf32>
    %338 = arith.addf %335, %337 : vector<2x128xf32>
    %339 = arith.addf %338, %16 : vector<2x128xf32>
    %340 = vector.extract_strided_slice %339 {offsets = [0, 0], sizes = [2, 96], strides = [1, 1]} : vector<2x128xf32> to vector<2x96xf32>
    %341 = arith.negf %340 : vector<2x96xf32>
    %342 = math.exp %341 : vector<2x96xf32>
    %cst_83 = arith.constant 1.000000e+00 : f32
    %343 = vector.broadcast %cst_83 : f32 to vector<2x96xf32>
    %344 = arith.addf %343, %342 : vector<2x96xf32>
    %345 = arith.divf %343, %344 : vector<2x96xf32>
    %346 = vector.extract_strided_slice %339 {offsets = [0, 96], sizes = [2, 32], strides = [1, 1]} : vector<2x128xf32> to vector<2x32xf32>
    %347 = math.tanh %346 : vector<2x32xf32>
    %348 = vector.extract_strided_slice %345 {offsets = [0, 0], sizes = [2, 32], strides = [1, 1]} : vector<2x96xf32> to vector<2x32xf32>
    %349 = vector.extract_strided_slice %345 {offsets = [0, 32], sizes = [2, 32], strides = [1, 1]} : vector<2x96xf32> to vector<2x32xf32>
    %350 = vector.extract_strided_slice %345 {offsets = [0, 64], sizes = [2, 32], strides = [1, 1]} : vector<2x96xf32> to vector<2x32xf32>
    %351 = arith.mulf %349, %304 : vector<2x32xf32>
    %352 = arith.mulf %348, %347 : vector<2x32xf32>
    %353 = arith.addf %351, %352 : vector<2x32xf32>
    %354 = math.tanh %353 : vector<2x32xf32>
    %355 = arith.mulf %350, %354 : vector<2x32xf32>
    %c7_i32_84 = arith.constant 7 : i32
    %356 = arith.subi %c7_i32_84, %c6_i32 : i32
    %357 = arith.index_cast %356 : i32 to index
    %c0_85 = arith.constant 0 : index
    %c0_86 = arith.constant 0 : index
    %358 = vector.load %arg11[%357, %c0_85, %c0_86] : memref<8x2x32xf32, #tpu.memory_space<vmem>>, vector<1x2x32xf32>
    %359 = vector.shape_cast %358 : vector<1x2x32xf32> to vector<2x32xf32>
    %360 = vector.shape_cast %355 : vector<2x32xf32> to vector<1x2x32xf32>
    tpu.vector_store %arg11[%357, %c0_85, %c0_86], %360 {strides = array<i32>} : memref<8x2x32xf32, #tpu.memory_space<vmem>>, vector<1x2x32xf32>,
    %c7_i32_87 = arith.constant 7 : i32
    %361 = arith.index_cast %c7_i32_87 : i32 to index
    %c0_88 = arith.constant 0 : index
    %c0_89 = arith.constant 0 : index
    %362 = vector.load %arg10[%361, %c0_88, %c0_89] : memref<8x2x128xf32, #tpu.memory_space<vmem>>, vector<1x2x128xf32>
    %363 = vector.shape_cast %362 : vector<1x2x128xf32> to vector<2x128xf32>
    %364 = arith.truncf %333 : vector<2x32xf32> to vector<2x32xbf16>
    %cst_90 = arith.constant dense<0.000000e+00> : vector<2x128xf32>
    %365 = tpu.matmul %364, %11, %cst_90 {dimension_numbers = #tpu.dot_dimension_numbers<[1], [0], [0], [1], [0, 0, 1, 1], [], []>} : vector<2x32xbf16>, vector<32x128xbf16>, vector<2x128xf32> -> vector<2x128xf32>
    %366 = arith.addf %363, %365 : vector<2x128xf32>
    %367 = vector.extract_strided_slice %366 {offsets = [0, 0], sizes = [2, 96], strides = [1, 1]} : vector<2x128xf32> to vector<2x96xf32>
    %368 = arith.negf %367 : vector<2x96xf32>
    %369 = math.exp %368 : vector<2x96xf32>
    %cst_91 = arith.constant 1.000000e+00 : f32
    %370 = vector.broadcast %cst_91 : f32 to vector<2x96xf32>
    %371 = arith.addf %370, %369 : vector<2x96xf32>
    %372 = arith.divf %370, %371 : vector<2x96xf32>
    %373 = vector.extract_strided_slice %366 {offsets = [0, 96], sizes = [2, 32], strides = [1, 1]} : vector<2x128xf32> to vector<2x32xf32>
    %374 = math.tanh %373 : vector<2x32xf32>
    %375 = vector.extract_strided_slice %372 {offsets = [0, 0], sizes = [2, 32], strides = [1, 1]} : vector<2x96xf32> to vector<2x32xf32>
    %376 = vector.extract_strided_slice %372 {offsets = [0, 32], sizes = [2, 32], strides = [1, 1]} : vector<2x96xf32> to vector<2x32xf32>
    %377 = vector.extract_strided_slice %372 {offsets = [0, 64], sizes = [2, 32], strides = [1, 1]} : vector<2x96xf32> to vector<2x32xf32>
    %378 = arith.mulf %376, %331 : vector<2x32xf32>
    %379 = arith.mulf %375, %374 : vector<2x32xf32>
    %380 = arith.addf %378, %379 : vector<2x32xf32>
    %381 = math.tanh %380 : vector<2x32xf32>
    %382 = arith.mulf %377, %381 : vector<2x32xf32>
    %383 = arith.truncf %382 : vector<2x32xf32> to vector<2x32xbf16>
    %cst_92 = arith.constant dense<0.000000e+00> : vector<2x128xf32>
    %384 = tpu.matmul %383, %12, %cst_92 {dimension_numbers = #tpu.dot_dimension_numbers<[1], [0], [0], [1], [0, 0, 1, 1], [], []>} : vector<2x32xbf16>, vector<32x128xbf16>, vector<2x128xf32> -> vector<2x128xf32>
    %385 = arith.truncf %355 : vector<2x32xf32> to vector<2x32xbf16>
    %cst_93 = arith.constant dense<0.000000e+00> : vector<2x128xf32>
    %386 = tpu.matmul %385, %13, %cst_93 {dimension_numbers = #tpu.dot_dimension_numbers<[1], [0], [0], [1], [0, 0, 1, 1], [], []>} : vector<2x32xbf16>, vector<32x128xbf16>, vector<2x128xf32> -> vector<2x128xf32>
    %387 = arith.addf %384, %386 : vector<2x128xf32>
    %388 = arith.addf %387, %16 : vector<2x128xf32>
    %389 = vector.extract_strided_slice %388 {offsets = [0, 0], sizes = [2, 96], strides = [1, 1]} : vector<2x128xf32> to vector<2x96xf32>
    %390 = arith.negf %389 : vector<2x96xf32>
    %391 = math.exp %390 : vector<2x96xf32>
    %cst_94 = arith.constant 1.000000e+00 : f32
    %392 = vector.broadcast %cst_94 : f32 to vector<2x96xf32>
    %393 = arith.addf %392, %391 : vector<2x96xf32>
    %394 = arith.divf %392, %393 : vector<2x96xf32>
    %395 = vector.extract_strided_slice %388 {offsets = [0, 96], sizes = [2, 32], strides = [1, 1]} : vector<2x128xf32> to vector<2x32xf32>
    %396 = math.tanh %395 : vector<2x32xf32>
    %397 = vector.extract_strided_slice %394 {offsets = [0, 0], sizes = [2, 32], strides = [1, 1]} : vector<2x96xf32> to vector<2x32xf32>
    %398 = vector.extract_strided_slice %394 {offsets = [0, 32], sizes = [2, 32], strides = [1, 1]} : vector<2x96xf32> to vector<2x32xf32>
    %399 = vector.extract_strided_slice %394 {offsets = [0, 64], sizes = [2, 32], strides = [1, 1]} : vector<2x96xf32> to vector<2x32xf32>
    %400 = arith.mulf %398, %353 : vector<2x32xf32>
    %401 = arith.mulf %397, %396 : vector<2x32xf32>
    %402 = arith.addf %400, %401 : vector<2x32xf32>
    %403 = math.tanh %402 : vector<2x32xf32>
    %404 = arith.mulf %399, %403 : vector<2x32xf32>
    %c7_i32_95 = arith.constant 7 : i32
    %405 = arith.subi %c7_i32_95, %c7_i32_87 : i32
    %406 = arith.index_cast %405 : i32 to index
    %c0_96 = arith.constant 0 : index
    %c0_97 = arith.constant 0 : index
    %407 = vector.load %arg11[%406, %c0_96, %c0_97] : memref<8x2x32xf32, #tpu.memory_space<vmem>>, vector<1x2x32xf32>
    %408 = vector.shape_cast %407 : vector<1x2x32xf32> to vector<2x32xf32>
    %409 = vector.shape_cast %404 : vector<2x32xf32> to vector<1x2x32xf32>
    tpu.vector_store %arg11[%406, %c0_96, %c0_97], %409 {strides = array<i32>} : memref<8x2x32xf32, #tpu.memory_space<vmem>>, vector<1x2x32xf32>,
    %c8_i32 = arith.constant 8 : i32
    %c0_98 = arith.constant 0 : index
    %c0_99 = arith.constant 0 : index
    %c0_100 = arith.constant 0 : index
    %410 = vector.load %arg11[%c0_98, %c0_99, %c0_100] : memref<8x2x32xf32, #tpu.memory_space<vmem>>, vector<8x2x32xf32>
    %411 = tpu.transpose %410, [1, 0, 2] : vector<8x2x32xf32> -> vector<2x8x32xf32>
    %c0_101 = arith.constant 0 : index
    %c0_102 = arith.constant 0 : index
    %c0_103 = arith.constant 0 : index
    %412 = vector.load %arg7[%c0_101, %c0_102, %c0_103] : memref<2x8x32xf32, #tpu.memory_space<vmem>>, vector<2x8x32xf32>
    tpu.vector_store %arg7[%c0_101, %c0_102, %c0_103], %411 {strides = array<i32>} : memref<2x8x32xf32, #tpu.memory_space<vmem>>, vector<2x8x32xf32>,
    %c0_104 = arith.constant 0 : index
    %c0_105 = arith.constant 0 : index
    %c0_106 = arith.constant 0 : index
    %413 = vector.load %arg8[%c0_104, %c0_105, %c0_106] : memref<2x2x32xf32, #tpu.memory_space<vmem>>, vector<1x2x32xf32>
    %414 = vector.shape_cast %413 : vector<1x2x32xf32> to vector<2x32xf32>
    %415 = vector.shape_cast %382 : vector<2x32xf32> to vector<1x2x32xf32>
    tpu.vector_store %arg8[%c0_104, %c0_105, %c0_106], %415 {strides = array<i32>} : memref<2x2x32xf32, #tpu.memory_space<vmem>>, vector<1x2x32xf32>,
    %c1 = arith.constant 1 : index
    %c0_107 = arith.constant 0 : index
    %c0_108 = arith.constant 0 : index
    %416 = vector.load %arg8[%c1, %c0_107, %c0_108] : memref<2x2x32xf32, #tpu.memory_space<vmem>>, vector<1x2x32xf32>
    %417 = vector.shape_cast %416 : vector<1x2x32xf32> to vector<2x32xf32>
    %418 = vector.shape_cast %404 : vector<2x32xf32> to vector<1x2x32xf32>
    tpu.vector_store %arg8[%c1, %c0_107, %c0_108], %418 {strides = array<i32>} : memref<2x2x32xf32, #tpu.memory_space<vmem>>, vector<1x2x32xf32>,
    %c0_109 = arith.constant 0 : index
    %c0_110 = arith.constant 0 : index
    %c0_111 = arith.constant 0 : index
    %419 = vector.load %arg9[%c0_109, %c0_110, %c0_111] : memref<2x2x32xf32, #tpu.memory_space<vmem>>, vector<1x2x32xf32>
    %420 = vector.shape_cast %419 : vector<1x2x32xf32> to vector<2x32xf32>
    %421 = vector.shape_cast %380 : vector<2x32xf32> to vector<1x2x32xf32>
    tpu.vector_store %arg9[%c0_109, %c0_110, %c0_111], %421 {strides = array<i32>} : memref<2x2x32xf32, #tpu.memory_space<vmem>>, vector<1x2x32xf32>,
    %c1_112 = arith.constant 1 : index
    %c0_113 = arith.constant 0 : index
    %c0_114 = arith.constant 0 : index
    %422 = vector.load %arg9[%c1_112, %c0_113, %c0_114] : memref<2x2x32xf32, #tpu.memory_space<vmem>>, vector<1x2x32xf32>
    %423 = vector.shape_cast %422 : vector<1x2x32xf32> to vector<2x32xf32>
    %424 = vector.shape_cast %402 : vector<2x32xf32> to vector<1x2x32xf32>
    tpu.vector_store %arg9[%c1_112, %c0_113, %c0_114], %424 {strides = array<i32>} : memref<2x2x32xf32, #tpu.memory_space<vmem>>, vector<1x2x32xf32>,
    return
  }
}

</mosaic_0001>

<llo_original>
// kernel: encoder_rnn_forward.1
$region0: #{encoder_rnn_forward.1}
  #allocation0 [shape = 'u32[]', space=smem, size = 0x4, offset = 0x4, fixed_abs, tag = 'smem constant byte address 0x4 - core index']
  #allocation1 [shape = 'u32[72,128]{1,0:T(1,128)}', space=vmem, size = 0x9000, scoped, tag = 'internal scratch']
  #allocation2 [shape = 'f32[8,2,128]{2,1,0:T(2,128)}', space=vmem, size = 0x2000, scoped, tag = 'scratch operand']
  #allocation3 [shape = 'f32[8,2,32]{2,1,0:T(2,128)}', space=vmem, size = 0x2000, scoped, tag = 'scratch operand']
  %s0 = inlined_call_operand.vmem [shape: f32[2,8,16], index: 0, kind: input, shape index: {}]
  %s1 = inlined_call_operand.hbm [shape: bf16[16,128], index: 1, kind: input, shape index: {}]
  %s2 = inlined_call_operand.hbm [shape: f32[1,128], index: 2, kind: input, shape index: {}]
  %s3 = inlined_call_operand.vmem [shape: bf16[32,128], index: 3, kind: input, shape index: {}]
  %s4 = inlined_call_operand.vmem [shape: bf16[32,128], index: 4, kind: input, shape index: {}]
  %s5 = inlined_call_operand.vmem [shape: bf16[32,128], index: 5, kind: input, shape index: {}]
  %s6 = inlined_call_operand.hbm [shape: f32[1,128], index: 6, kind: input, shape index: {}]
  %s7 = inlined_call_operand.hbm [shape: f32[2,8,32], index: 7, kind: output, shape index: {0}]
  %s8 = inlined_call_operand.hbm [shape: f32[2,2,32], index: 8, kind: output, shape index: {1}]
  %s9 = inlined_call_operand.hbm [shape: f32[2,2,32], index: 9, kind: output, shape index: {2}]
  %10 = xla_tuple %s7, %s8, %s9
  %s11 = sld [smem:[#allocation0]]
  $region66: #{encoder_rnn_forward.1} parent=0
    _
  %s13 = ssub.s32 1, %s11
  %s14 = scalar_select 0, %s13, %s11
  $region1: #{encoder_rnn_forward.1} parent=0
    #allocation4 [shape = 'u8[4096]{0}', space=vmem, size = 0x1000, scoped, tag = 'input window, operand 1, single buffered']
    #allocation5 [shape = 's32[1]{0}', space=sflag, size = 0x4, scoped, tag = 'scoped memory for encoder_rnn_forward.1']
    #allocation6 [shape = 's32[1]{0}', space=sflag, size = 0x4, scoped, tag = 'scoped memory for encoder_rnn_forward.1']
    #allocation7 [shape = 'u8[512]{0}', space=vmem, size = 0x400, scoped, tag = 'input window, operand 2, single buffered']
    #allocation8 [shape = 's32[1]{0}', space=sflag, size = 0x4, scoped, tag = 'scoped memory for encoder_rnn_forward.1']
    #allocation9 [shape = 'u8[512]{0}', space=vmem, size = 0x400, scoped, tag = 'input window, operand 6, single buffered']
    #allocation10 [shape = 'u8[8192]{0}', space=vmem, size = 0x2000, scoped, tag = 'output window, operand 0, single buffered']
    #allocation11 [shape = 'u8[2048]{0}', space=vmem, size = 0x800, scoped, tag = 'output window, operand 1, single buffered']
    #allocation12 [shape = 's32[1]{0}', space=sflag, size = 0x4, scoped, tag = 'scoped memory for encoder_rnn_forward.1']
    #allocation13 [shape = 'u8[2048]{0}', space=vmem, size = 0x800, scoped, tag = 'output window, operand 2, single buffered']
    %15 = vsyncpa [#allocation5], 0
    %16 = vsyncpa [#allocation8], 0
    %17 = vsyncpa [#allocation6], 0
    %18 = vsyncpa [#allocation12], 0
    // Predicated region
    $region2: #{encoder_rnn_forward.1} parent=1 // pred_check
      _
    $region3: #{encoder_rnn_forward.1} parent=1 // pred_check_branch
      %20 = sbr.rel (0) target = $region5
    $region4: #{encoder_rnn_forward.1} parent=1 // pred_region
      _
    $region5: #{encoder_rnn_forward.1} parent=1 // pred_fallthru
      _
    // Predicated region
    $region6: #{encoder_rnn_forward.1} parent=1 // pred_check
      _
    $region7: #{encoder_rnn_forward.1} parent=1 // pred_check_branch
      %22 = sbr.rel (0) target = $region9
    $region8: #{encoder_rnn_forward.1} parent=1 // pred_region
      %24 = vsyncadd [#allocation5], 0
      %s25 = sshll.u32 %s1, 4
      %s26 = int_to_ptr.hbm [resolvable:$true] %s25
      %s27 = sshll.u32 [#allocation4], 4
      %s28 = int_to_ptr.vmem [resolvable:$true] %s27
      %33 = dma.hbm_to_vmem [thread:$0]  %s26, 128, %s28, [#allocation5], 64, 64, 4
    $region9: #{encoder_rnn_forward.1} parent=1 // pred_fallthru
      _
    // Predicated region
    $region10: #{encoder_rnn_forward.1} parent=1 // pred_check
      _
    $region11: #{encoder_rnn_forward.1} parent=1 // pred_check_branch
      %35 = sbr.rel (0) target = $region13
    $region12: #{encoder_rnn_forward.1} parent=1 // pred_region
      %37 = vsyncadd [#allocation8], 0
      %s39 = sshll.u32 %s2, 4
      %s40 = int_to_ptr.hbm [resolvable:$true] %s39
      %s41 = sshll.u32 [#allocation7], 4
      %s42 = int_to_ptr.vmem [resolvable:$true] %s41
      %44 = dma.hbm_to_vmem [thread:$0]  %s40, 16, %s42, [#allocation8]
    $region13: #{encoder_rnn_forward.1} parent=1 // pred_fallthru
      _
    // Predicated region
    $region14: #{encoder_rnn_forward.1} parent=1 // pred_check
      _
    $region15: #{encoder_rnn_forward.1} parent=1 // pred_check_branch
      %46 = sbr.rel (0) target = $region17
    $region16: #{encoder_rnn_forward.1} parent=1 // pred_region
      _
    $region17: #{encoder_rnn_forward.1} parent=1 // pred_fallthru
      _
    // Predicated region
    $region18: #{encoder_rnn_forward.1} parent=1 // pred_check
      _
    $region19: #{encoder_rnn_forward.1} parent=1 // pred_check_branch
      %48 = sbr.rel (0) target = $region21
    $region20: #{encoder_rnn_forward.1} parent=1 // pred_region
      _
    $region21: #{encoder_rnn_forward.1} parent=1 // pred_fallthru
      _
    // Predicated region
    $region22: #{encoder_rnn_forward.1} parent=1 // pred_check
      _
    $region23: #{encoder_rnn_forward.1} parent=1 // pred_check_branch
      %50 = sbr.rel (0) target = $region25
    $region24: #{encoder_rnn_forward.1} parent=1 // pred_region
      _
    $region25: #{encoder_rnn_forward.1} parent=1 // pred_fallthru
      _
    // Predicated region
    $region26: #{encoder_rnn_forward.1} parent=1 // pred_check
      _
    $region27: #{encoder_rnn_forward.1} parent=1 // pred_check_branch
      %52 = sbr.rel (0) target = $region29
    $region28: #{encoder_rnn_forward.1} parent=1 // pred_region
      %54 = vsyncadd [#allocation8], 0
      %s56 = sshll.u32 %s6, 4
      %s57 = int_to_ptr.hbm [resolvable:$true] %s56
      %s58 = sshll.u32 [#allocation9], 4
      %s59 = int_to_ptr.vmem [resolvable:$true] %s58
      %61 = dma.hbm_to_vmem [thread:$0]  %s57, 16, %s59, [#allocation8]
    $region29: #{encoder_rnn_forward.1} parent=1 // pred_fallthru
      _
    // Predicated region
    $region30: #{encoder_rnn_forward.1} parent=1 // pred_check
      _
    $region31: #{encoder_rnn_forward.1} parent=1 // pred_check_branch
      %63 = sbr.rel (0) target = $region33
    $region32: #{encoder_rnn_forward.1} parent=1 // pred_region
      %65 = dma.done [#allocation5], 128
    $region33: #{encoder_rnn_forward.1} parent=1 // pred_fallthru
      _
    // Predicated region
    $region34: #{encoder_rnn_forward.1} parent=1 // pred_check
      _
    $region35: #{encoder_rnn_forward.1} parent=1 // pred_check_branch
      %67 = sbr.rel (0) target = $region37
    $region36: #{encoder_rnn_forward.1} parent=1 // pred_region
      %69 = dma.done [#allocation8], 16
    $region37: #{encoder_rnn_forward.1} parent=1 // pred_fallthru
      _
    // Predicated region
    $region38: #{encoder_rnn_forward.1} parent=1 // pred_check
      _
    $region39: #{encoder_rnn_forward.1} parent=1 // pred_check_branch
      %71 = sbr.rel (0) target = $region41
    $region40: #{encoder_rnn_forward.1} parent=1 // pred_region
      %73 = dma.done [#allocation8], 16
    $region41: #{encoder_rnn_forward.1} parent=1 // pred_fallthru
      _
    %v75 = vld [vmem:[%s0] sm:$0xff]
    %v76 = vld [vmem:[%s0 + $0x8] sm:$0xff]
    %v77 = vrot.slane %v75, 4
    %vm78 = vcmask 1047556
    %v79 = vsel %vm78, 0.0, %v77
    %v81 = vunpack.c.l.s4 1983009808
    %v82 = vunpack.c.0.s8 %v81
    %v83 = vperm.slane %v75, %v82
    %v85 = vunpack.c.l.s4 1983009808
    %v86 = vunpack.c.0.s8 %v85
    %v87 = vperm.slane %v79, %v86
    %v88 = vrot.slane %v76, 4
    %v89 = vsel %vm78, 0.0, %v88
    %v91 = vunpack.c.l.s4 1983009808
    %v92 = vunpack.c.0.s8 %v91
    %v93 = vperm.slane %v76, %v92
    %v95 = vunpack.c.l.s4 1983009808
    %v96 = vunpack.c.0.s8 %v95
    %v97 = vperm.slane %v89, %v96
    %v98 = vrot.slane %v93, 4
    %v99 = vsel %vm78, %v98, %v83
    %v100 = vrot.slane %v83, 4
    %v101 = vsel %vm78, %v93, %v100
    %v103 = vunpack.c.l.s4 1934713408
    %v104 = vunpack.c.0.s8 %v103
    %v105 = vperm.slane %v99, %v104
    %v107 = vunpack.c.l.s4 1934713408
    %v108 = vunpack.c.0.s8 %v107
    %v109 = vperm.slane %v101, %v108
    %v110 = vrot.slane %v97, 4
    %v111 = vsel %vm78, %v110, %v87
    %v112 = vrot.slane %v87, 4
    %v113 = vsel %vm78, %v97, %v112
    %v115 = vunpack.c.l.s4 1934713408
    %v116 = vunpack.c.0.s8 %v115
    %v117 = vperm.slane %v111, %v116
    %v119 = vunpack.c.l.s4 1934713408
    %v120 = vunpack.c.0.s8 %v119
    %v121 = vperm.slane %v113, %v120
    %v122 = vrot.slane %v105, 4
    %v123 = vsel %vm78, 0.0, %v122
    %v124 = vrot.slane %v109, 4
    %v125 = vsel %vm78, 0.0, %v124
    %v126 = vrot.slane %v117, 4
    %v127 = vsel %vm78, 0.0, %v126
    %v128 = vrot.slane %v121, 4
    %v129 = vsel %vm78, 0.0, %v128
    %138 = vst [vmem:[#allocation1] ss:$4 sm:$0xff] %v105
    %s139 = scalar_lea.vmem [#allocation1], 1
    %140 = vst [vmem:[%s139] ss:$4 sm:$0xff] %v123
    %s141 = scalar_lea.vmem [#allocation1], 2
    %142 = vst [vmem:[%s141] ss:$4 sm:$0xff] %v109
    %s143 = scalar_lea.vmem [#allocation1], 3
    %144 = vst [vmem:[%s143] ss:$4 sm:$0xff] %v125
    %s145 = scalar_lea.vmem [#allocation1], 32
    %146 = vst [vmem:[%s145] ss:$4 sm:$0xff] %v117
    %s147 = scalar_lea.vmem [#allocation1], 33
    %148 = vst [vmem:[%s147] ss:$4 sm:$0xff] %v127
    %s149 = scalar_lea.vmem [#allocation1], 34
    %150 = vst [vmem:[%s149] ss:$4 sm:$0xff] %v121
    %s151 = scalar_lea.vmem [#allocation1], 35
    %152 = vst [vmem:[%s151] ss:$4 sm:$0xff] %v129
    %v153 = vld.sshfl [vmem:[#allocation1] sm:$0xff pattern:$0x73625140]
    %v154 = vld.sshfl [vmem:[#allocation1 + $0x20] sm:$0xff pattern:$0x73625140]
    %v157 = vpack.c.bf16 %v154, %v153
    %v158 = vld [vmem:[#allocation4] sm:$0xf]
    %v159 = vld [vmem:[#allocation4 + $0x4] sm:$0xf]
    %v160 = vld [vmem:[#allocation7] sm:$0x1]
    %v162 = vperm.slane %v160, 0
    %v166 = vunpack.c.l.b16 %v158
    %v167 = vunpack.c.l.b16 %v159
    %v168 = vpack.c.b16 %v167, %v166
    %vm170 = vcmask 130048
    %v172 = vsel %vm170, %v157, 0
    %174 = vmatpush.bf16.msra.mxu0 0
    %175 = vmatpush.bf16.msra.mxu0 0
    %176 = vmatpush.bf16.msra.mxu0 0
    %177 = vmatpush.bf16.msra.mxu0 0
    %178 = vmatpush.bf16.msra.mxu0 0
    %179 = vmatpush.bf16.msra.mxu0 0
    %180 = vmatpush.bf16.msra.mxu0 0
    %181 = vmatpush.bf16.msra.mxu0 %v168
    %182 = vmatmul.bf16.gmra.mxu0 %v172
    %v183 = vpop.f32.mrf.mxu0
    %v184 = vadd.f32 %v162, %v183
    %v185 = vpop.f32.mrf.mxu0
    %v186 = vadd.f32 %v162, %v185
    %187 = vdwg.mxu0
    %v190 = vrot.slane %v184, 2
    %v191 = vrot.slane %v184, 4
    %v192 = vrot.slane %v184, 6
    %v193 = vrot.slane %v186, 2
    %v194 = vrot.slane %v186, 4
    %v195 = vrot.slane %v186, 6
    %202 = vst [vmem:[#allocation2] sm:$0x3] %v184
    %203 = vst [vmem:[#allocation2 + $0x2] sm:$0x3] %v190
    %204 = vst [vmem:[#allocation2 + $0x4] sm:$0x3] %v191
    %205 = vst [vmem:[#allocation2 + $0x6] sm:$0x3] %v192
    %206 = vst [vmem:[#allocation2 + $0x8] sm:$0x3] %v186
    %207 = vst [vmem:[#allocation2 + $0xa] sm:$0x3] %v193
    %208 = vst [vmem:[#allocation2 + $0xc] sm:$0x3] %v194
    %209 = vst [vmem:[#allocation2 + $0xe] sm:$0x3] %v195
    %v210 = vld [vmem:[%s3] sm:$0xf]
    %v211 = vld [vmem:[%s3 + $0x4] sm:$0xf]
    %v212 = vld [vmem:[%s3 + $0x8] sm:$0xf]
    %v213 = vld [vmem:[%s3 + $0xc] sm:$0xf]
    %v214 = vld [vmem:[%s4] sm:$0xf]
    %v215 = vld [vmem:[%s4 + $0x4] sm:$0xf]
    %v216 = vld [vmem:[%s4 + $0x8] sm:$0xf]
    %v217 = vld [vmem:[%s4 + $0xc] sm:$0xf]
    %v218 = vld [vmem:[%s5] sm:$0xf]
    %v219 = vld [vmem:[%s5 + $0x4] sm:$0xf]
    %v220 = vld [vmem:[%s5 + $0x8] sm:$0xf]
    %v221 = vld [vmem:[%s5 + $0xc] sm:$0xf]
    %v222 = vld [vmem:[#allocation9] sm:$0x1]
    %v224 = vperm.slane %v222, 0
    %v226 = vld [vmem:[#allocation2] sm:$0x3]
    %v231 = vunpack.c.l.b16 %v210
    %v232 = vunpack.c.l.b16 %v211
    %v233 = vunpack.c.l.b16 %v212
    %v234 = vunpack.c.l.b16 %v213
    %v235 = vpack.c.b16 %v232, %v231
    %v236 = vpack.c.b16 %v234, %v233
    %vm239 = vcmask 261120
    %v241 = vsel %vm239, 0, 0
    %243 = vmatpush.bf16.msra.mxu0 0
    %244 = vmatpush.bf16.msra.mxu0 0
    %245 = vmatpush.bf16.msra.mxu0 0
    %246 = vmatpush.bf16.msra.mxu0 0
    %247 = vmatpush.bf16.msra.mxu0 0
    %248 = vmatpush.bf16.msra.mxu0 0
    %249 = vmatpush.bf16.msra.mxu0 %v236
    %250 = vmatpush.bf16.msra.mxu0 %v235
    %251 = vmatmul.bf16.gmra.mxu0 %v241
    %v252 = vpop.f32.mrf.mxu0
    %v253 = vadd.f32 0.0, %v252
    %v254 = vpop.f32.mrf.mxu0
    %255 = vdwg.mxu0
    %v256 = vadd.f32 %v226, %v253
    %v257 = vxor.u32 %v256, 2147483648
    %v258 = vmul.f32 %v257, 1.442695
    %v259 = vpow.pop %v258
    %v260 = vadd.f32 %v259, 1.0
    %v261 = vrcp.pop %v260
    %v262 = vmul.f32 %v260, %v261
    %v263 = vsub.f32 1.0, %v262
    %v264 = vmul.f32 %v261, %v263
    %v265 = vadd.f32 %v261, %v264
    %vm266 = vweird.f32 %v260
    %vm267 = vweird.f32 %v261
    %vm268 = vmor %vm266, %vm267
    %v269 = vsel %vm268, %v261, %v265
    %v270 = vand.u32 2147483647, %v260
    %vm271 = vcmp.eq.f32.partialorder %v270, 8.507059e+37
    %v272 = vand.u32 %v260, 2147483648
    %v273 = vor.u32 1.1754944e-38, %v272
    %v274 = vsel %vm271, %v273, %v269
    %v275 = vmul.f32 1.0, %v274
    %v276 = vtanh.pop %v256
    %v277 = vmul.f32 %v275, 0.0
    %279 = vrot.lane.b32.xlu0 %v276, 32
    %v280 = vpop.permute.xlu0 %279
    %v282 = vmul.f32 %v275, %v280
    %284 = vrot.lane.b32.xlu0 %v282, 32
    %v285 = vpop.permute.xlu0 %284
    %v287 = vadd.f32 %v277, %v285
    %v288 = vtanh.pop %v287
    %290 = vrot.lane.b32.xlu0 %v288, 32
    %v291 = vpop.permute.xlu0 %290
    %v293 = vmul.f32 %v275, %v291
    %v294 = vpack.c.bf16 %v293, %v293
    %v299 = vunpack.c.l.b16 %v218
    %v300 = vunpack.c.l.b16 %v219
    %v301 = vunpack.c.l.b16 %v220
    %v302 = vunpack.c.l.b16 %v221
    %v303 = vpack.c.b16 %v300, %v299
    %v304 = vpack.c.b16 %v302, %v301
    %307 = vmatpush.bf16.msra.mxu0 0
    %308 = vmatpush.bf16.msra.mxu0 0
    %309 = vmatpush.bf16.msra.mxu0 0
    %310 = vmatpush.bf16.msra.mxu0 0
    %311 = vmatpush.bf16.msra.mxu0 0
    %312 = vmatpush.bf16.msra.mxu0 0
    %313 = vmatpush.bf16.msra.mxu0 %v304
    %314 = vmatpush.bf16.msra.mxu0 %v303
    %315 = vmatmul.bf16.gmra.mxu0 %v241
    %v316 = vpop.f32.mrf.mxu0
    %v317 = vadd.f32 0.0, %v316
    %v318 = vpop.f32.mrf.mxu0
    %319 = vdwg.mxu0
    %321 = vrot.lane.b32.xlu0 %v294, 64
    %v322 = vpop.permute.xlu0 %321
    %v327 = vunpack.c.l.b16 %v214
    %v328 = vunpack.c.l.b16 %v215
    %v329 = vunpack.c.l.b16 %v216
    %v330 = vunpack.c.l.b16 %v217
    %v331 = vpack.c.b16 %v328, %v327
    %v332 = vpack.c.b16 %v330, %v329
    %v336 = vsel %vm239, %v322, 0
    %338 = vmatpush.bf16.msra.mxu0 0
    %339 = vmatpush.bf16.msra.mxu0 0
    %340 = vmatpush.bf16.msra.mxu0 0
    %341 = vmatpush.bf16.msra.mxu0 0
    %342 = vmatpush.bf16.msra.mxu0 0
    %343 = vmatpush.bf16.msra.mxu0 0
    %344 = vmatpush.bf16.msra.mxu0 %v332
    %345 = vmatpush.bf16.msra.mxu0 %v331
    %346 = vmatmul.bf16.gmra.mxu0 %v336
    %v347 = vpop.f32.mrf.mxu0
    %v348 = vadd.f32 %v317, %v347
    %v349 = vpop.f32.mrf.mxu0
    %350 = vdwg.mxu0
    %v351 = vadd.f32 %v348, %v224
    %v352 = vxor.u32 %v351, 2147483648
    %v353 = vmul.f32 %v352, 1.442695
    %v354 = vpow.pop %v353
    %v355 = vadd.f32 %v354, 1.0
    %v356 = vrcp.pop %v355
    %v357 = vmul.f32 %v355, %v356
    %v358 = vsub.f32 1.0, %v357
    %v359 = vmul.f32 %v356, %v358
    %v360 = vadd.f32 %v356, %v359
    %vm361 = vweird.f32 %v355
    %vm362 = vweird.f32 %v356
    %vm363 = vmor %vm361, %vm362
    %v364 = vsel %vm363, %v356, %v360
    %v365 = vand.u32 2147483647, %v355
    %vm366 = vcmp.eq.f32.partialorder %v365, 8.507059e+37
    %v367 = vand.u32 %v355, 2147483648
    %v368 = vor.u32 1.1754944e-38, %v367
    %v369 = vsel %vm366, %v368, %v364
    %v370 = vmul.f32 1.0, %v369
    %v371 = vtanh.pop %v351
    %v372 = vmul.f32 %v370, 0.0
    %374 = vrot.lane.b32.xlu0 %v371, 32
    %v375 = vpop.permute.xlu0 %374
    %v377 = vmul.f32 %v370, %v375
    %379 = vrot.lane.b32.xlu0 %v377, 32
    %v380 = vpop.permute.xlu0 %379
    %v382 = vadd.f32 %v372, %v380
    %v383 = vtanh.pop %v382
    %385 = vrot.lane.b32.xlu0 %v383, 32
    %v386 = vpop.permute.xlu0 %385
    %v388 = vmul.f32 %v370, %v386
    %390 = vrot.lane.b32.xlu0 %v388, 64
    %v391 = vpop.permute.xlu0 %390
    %s393 = scalar_lea.vmem [#allocation3], 14
    %vm394 = vcmask 254976
    %395 = vst.msk [vmem:[%s393] sm:$0x3] %vm394, %v391
    %s396 = scalar_lea.vmem [#allocation2], 2
    %v397 = vld [vmem:[%s396] sm:$0x3]
    %398 = vmatpush.bf16.msra.mxu0 0
    %399 = vmatpush.bf16.msra.mxu0 0
    %400 = vmatpush.bf16.msra.mxu0 0
    %401 = vmatpush.bf16.msra.mxu0 0
    %402 = vmatpush.bf16.msra.mxu0 0
    %403 = vmatpush.bf16.msra.mxu0 0
    %404 = vmatpush.bf16.msra.mxu0 %v236
    %405 = vmatpush.bf16.msra.mxu0 %v235
    %406 = vmatmul.bf16.gmra.mxu0 %v336
    %v407 = vpop.f32.mrf.mxu0
    %v408 = vadd.f32 0.0, %v407
    %v409 = vpop.f32.mrf.mxu0
    %410 = vdwg.mxu0
    %v411 = vadd.f32 %v397, %v408
    %v412 = vxor.u32 %v411, 2147483648
    %v413 = vmul.f32 %v412, 1.442695
    %v414 = vpow.pop %v413
    %v415 = vadd.f32 %v414, 1.0
    %v416 = vrcp.pop %v415
    %v417 = vmul.f32 %v415, %v416
    %v418 = vsub.f32 1.0, %v417
    %v419 = vmul.f32 %v416, %v418
    %v420 = vadd.f32 %v416, %v419
    %vm421 = vweird.f32 %v415
    %vm422 = vweird.f32 %v416
    %vm423 = vmor %vm421, %vm422
    %v424 = vsel %vm423, %v416, %v420
    %v425 = vand.u32 2147483647, %v415
    %vm426 = vcmp.eq.f32.partialorder %v425, 8.507059e+37
    %v427 = vand.u32 %v415, 2147483648
    %v428 = vor.u32 1.1754944e-38, %v427
    %v429 = vsel %vm426, %v428, %v424
    %v430 = vmul.f32 1.0, %v429
    %v431 = vtanh.pop %v411
    %v432 = vmul.f32 %v430, %v287
    %434 = vrot.lane.b32.xlu0 %v431, 32
    %v435 = vpop.permute.xlu0 %434
    %v437 = vmul.f32 %v430, %v435
    %439 = vrot.lane.b32.xlu0 %v437, 32
    %v440 = vpop.permute.xlu0 %439
    %v442 = vadd.f32 %v432, %v440
    %v443 = vtanh.pop %v442
    %445 = vrot.lane.b32.xlu0 %v443, 32
    %v446 = vpop.permute.xlu0 %445
    %v448 = vmul.f32 %v430, %v446
    %v449 = vpack.c.bf16 %v448, %v448
    %v450 = vpack.c.bf16 %v388, %v388
    %452 = vrot.lane.b32.xlu0 %v450, 64
    %v453 = vpop.permute.xlu0 %452
    %v455 = vsel %vm239, %v453, 0
    %457 = vmatpush.bf16.msra.mxu0 0
    %458 = vmatpush.bf16.msra.mxu0 0
    %459 = vmatpush.bf16.msra.mxu0 0
    %460 = vmatpush.bf16.msra.mxu0 0
    %461 = vmatpush.bf16.msra.mxu0 0
    %462 = vmatpush.bf16.msra.mxu0 0
    %463 = vmatpush.bf16.msra.mxu0 %v304
    %464 = vmatpush.bf16.msra.mxu0 %v303
    %465 = vmatmul.bf16.gmra.mxu0 %v455
    %v466 = vpop.f32.mrf.mxu0
    %v467 = vadd.f32 0.0, %v466
    %v468 = vpop.f32.mrf.mxu0
    %469 = vdwg.mxu0
    %471 = vrot.lane.b32.xlu0 %v449, 64
    %v472 = vpop.permute.xlu0 %471
    %v474 = vsel %vm239, %v472, 0
    %476 = vmatpush.bf16.msra.mxu0 0
    %477 = vmatpush.bf16.msra.mxu0 0
    %478 = vmatpush.bf16.msra.mxu0 0
    %479 = vmatpush.bf16.msra.mxu0 0
    %480 = vmatpush.bf16.msra.mxu0 0
    %481 = vmatpush.bf16.msra.mxu0 0
    %482 = vmatpush.bf16.msra.mxu0 %v332
    %483 = vmatpush.bf16.msra.mxu0 %v331
    %484 = vmatmul.bf16.gmra.mxu0 %v474
    %v485 = vpop.f32.mrf.mxu0
    %v486 = vadd.f32 %v467, %v485
    %v487 = vpop.f32.mrf.mxu0
    %488 = vdwg.mxu0
    %v489 = vadd.f32 %v486, %v224
    %v490 = vxor.u32 %v489, 2147483648
    %v491 = vmul.f32 %v490, 1.442695
    %v492 = vpow.pop %v491
    %v493 = vadd.f32 %v492, 1.0
    %v494 = vrcp.pop %v493
    %v495 = vmul.f32 %v493, %v494
    %v496 = vsub.f32 1.0, %v495
    %v497 = vmul.f32 %v494, %v496
    %v498 = vadd.f32 %v494, %v497
    %vm499 = vweird.f32 %v493
    %vm500 = vweird.f32 %v494
    %vm501 = vmor %vm499, %vm500
    %v502 = vsel %vm501, %v494, %v498
    %v503 = vand.u32 2147483647, %v493
    %vm504 = vcmp.eq.f32.partialorder %v503, 8.507059e+37
    %v505 = vand.u32 %v493, 2147483648
    %v506 = vor.u32 1.1754944e-38, %v505
    %v507 = vsel %vm504, %v506, %v502
    %v508 = vmul.f32 1.0, %v507
    %v509 = vtanh.pop %v489
    %v510 = vmul.f32 %v508, %v382
    %512 = vrot.lane.b32.xlu0 %v509, 32
    %v513 = vpop.permute.xlu0 %512
    %v515 = vmul.f32 %v508, %v513
    %517 = vrot.lane.b32.xlu0 %v515, 32
    %v518 = vpop.permute.xlu0 %517
    %v520 = vadd.f32 %v510, %v518
    %v521 = vtanh.pop %v520
    %523 = vrot.lane.b32.xlu0 %v521, 32
    %v524 = vpop.permute.xlu0 %523
    %v526 = vmul.f32 %v508, %v524
    %528 = vrot.lane.b32.xlu0 %v526, 64
    %v529 = vpop.permute.xlu0 %528
    %s531 = scalar_lea.vmem [#allocation3], 12
    %532 = vst.msk [vmem:[%s531] sm:$0x3] %vm394, %v529
    %s533 = scalar_lea.vmem [#allocation2], 4
    %v534 = vld [vmem:[%s533] sm:$0x3]
    %535 = vmatpush.bf16.msra.mxu0 0
    %536 = vmatpush.bf16.msra.mxu0 0
    %537 = vmatpush.bf16.msra.mxu0 0
    %538 = vmatpush.bf16.msra.mxu0 0
    %539 = vmatpush.bf16.msra.mxu0 0
    %540 = vmatpush.bf16.msra.mxu0 0
    %541 = vmatpush.bf16.msra.mxu0 %v236
    %542 = vmatpush.bf16.msra.mxu0 %v235
    %543 = vmatmul.bf16.gmra.mxu0 %v474
    %v544 = vpop.f32.mrf.mxu0
    %v545 = vadd.f32 0.0, %v544
    %v546 = vpop.f32.mrf.mxu0
    %547 = vdwg.mxu0
    %v548 = vadd.f32 %v534, %v545
    %v549 = vxor.u32 %v548, 2147483648
    %v550 = vmul.f32 %v549, 1.442695
    %v551 = vpow.pop %v550
    %v552 = vadd.f32 %v551, 1.0
    %v553 = vrcp.pop %v552
    %v554 = vmul.f32 %v552, %v553
    %v555 = vsub.f32 1.0, %v554
    %v556 = vmul.f32 %v553, %v555
    %v557 = vadd.f32 %v553, %v556
    %vm558 = vweird.f32 %v552
    %vm559 = vweird.f32 %v553
    %vm560 = vmor %vm558, %vm559
    %v561 = vsel %vm560, %v553, %v557
    %v562 = vand.u32 2147483647, %v552
    %vm563 = vcmp.eq.f32.partialorder %v562, 8.507059e+37
    %v564 = vand.u32 %v552, 2147483648
    %v565 = vor.u32 1.1754944e-38, %v564
    %v566 = vsel %vm563, %v565, %v561
    %v567 = vmul.f32 1.0, %v566
    %v568 = vtanh.pop %v548
    %v569 = vmul.f32 %v567, %v442
    %571 = vrot.lane.b32.xlu0 %v568, 32
    %v572 = vpop.permute.xlu0 %571
    %v574 = vmul.f32 %v567, %v572
    %576 = vrot.lane.b32.xlu0 %v574, 32
    %v577 = vpop.permute.xlu0 %576
    %v579 = vadd.f32 %v569, %v577
    %v580 = vtanh.pop %v579
    %582 = vrot.lane.b32.xlu0 %v580, 32
    %v583 = vpop.permute.xlu0 %582
    %v585 = vmul.f32 %v567, %v583
    %v586 = vpack.c.bf16 %v585, %v585
    %v587 = vpack.c.bf16 %v526, %v526
    %589 = vrot.lane.b32.xlu0 %v587, 64
    %v590 = vpop.permute.xlu0 %589
    %v592 = vsel %vm239, %v590, 0
    %594 = vmatpush.bf16.msra.mxu0 0
    %595 = vmatpush.bf16.msra.mxu0 0
    %596 = vmatpush.bf16.msra.mxu0 0
    %597 = vmatpush.bf16.msra.mxu0 0
    %598 = vmatpush.bf16.msra.mxu0 0
    %599 = vmatpush.bf16.msra.mxu0 0
    %600 = vmatpush.bf16.msra.mxu0 %v304
    %601 = vmatpush.bf16.msra.mxu0 %v303
    %602 = vmatmul.bf16.gmra.mxu0 %v592
    %v603 = vpop.f32.mrf.mxu0
    %v604 = vadd.f32 0.0, %v603
    %v605 = vpop.f32.mrf.mxu0
    %606 = vdwg.mxu0
    %608 = vrot.lane.b32.xlu0 %v586, 64
    %v609 = vpop.permute.xlu0 %608
    %v611 = vsel %vm239, %v609, 0
    %613 = vmatpush.bf16.msra.mxu0 0
    %614 = vmatpush.bf16.msra.mxu0 0
    %615 = vmatpush.bf16.msra.mxu0 0
    %616 = vmatpush.bf16.msra.mxu0 0
    %617 = vmatpush.bf16.msra.mxu0 0
    %618 = vmatpush.bf16.msra.mxu0 0
    %619 = vmatpush.bf16.msra.mxu0 %v332
    %620 = vmatpush.bf16.msra.mxu0 %v331
    %621 = vmatmul.bf16.gmra.mxu0 %v611
    %v622 = vpop.f32.mrf.mxu0
    %v623 = vadd.f32 %v604, %v622
    %v624 = vpop.f32.mrf.mxu0
    %625 = vdwg.mxu0
    %v626 = vadd.f32 %v623, %v224
    %v627 = vxor.u32 %v626, 2147483648
    %v628 = vmul.f32 %v627, 1.442695
    %v629 = vpow.pop %v628
    %v630 = vadd.f32 %v629, 1.0
    %v631 = vrcp.pop %v630
    %v632 = vmul.f32 %v630, %v631
    %v633 = vsub.f32 1.0, %v632
    %v634 = vmul.f32 %v631, %v633
    %v635 = vadd.f32 %v631, %v634
    %vm636 = vweird.f32 %v630
    %vm637 = vweird.f32 %v631
    %vm638 = vmor %vm636, %vm637
    %v639 = vsel %vm638, %v631, %v635
    %v640 = vand.u32 2147483647, %v630
    %vm641 = vcmp.eq.f32.partialorder %v640, 8.507059e+37
    %v642 = vand.u32 %v630, 2147483648
    %v643 = vor.u32 1.1754944e-38, %v642
    %v644 = vsel %vm641, %v643, %v639
    %v645 = vmul.f32 1.0, %v644
    %v646 = vtanh.pop %v626
    %v647 = vmul.f32 %v645, %v520
    %649 = vrot.lane.b32.xlu0 %v646, 32
    %v650 = vpop.permute.xlu0 %649
    %v652 = vmul.f32 %v645, %v650
    %654 = vrot.lane.b32.xlu0 %v652, 32
    %v655 = vpop.permute.xlu0 %654
    %v657 = vadd.f32 %v647, %v655
    %v658 = vtanh.pop %v657
    %660 = vrot.lane.b32.xlu0 %v658, 32
    %v661 = vpop.permute.xlu0 %660
    %v663 = vmul.f32 %v645, %v661
    %665 = vrot.lane.b32.xlu0 %v663, 64
    %v666 = vpop.permute.xlu0 %665
    %s668 = scalar_lea.vmem [#allocation3], 10
    %669 = vst.msk [vmem:[%s668] sm:$0x3] %vm394, %v666
    %s670 = scalar_lea.vmem [#allocation2], 6
    %v671 = vld [vmem:[%s670] sm:$0x3]
    %672 = vmatpush.bf16.msra.mxu0 0
    %673 = vmatpush.bf16.msra.mxu0 0
    %674 = vmatpush.bf16.msra.mxu0 0
    %675 = vmatpush.bf16.msra.mxu0 0
    %676 = vmatpush.bf16.msra.mxu0 0
    %677 = vmatpush.bf16.msra.mxu0 0
    %678 = vmatpush.bf16.msra.mxu0 %v236
    %679 = vmatpush.bf16.msra.mxu0 %v235
    %680 = vmatmul.bf16.gmra.mxu0 %v611
    %v681 = vpop.f32.mrf.mxu0
    %v682 = vadd.f32 0.0, %v681
    %v683 = vpop.f32.mrf.mxu0
    %684 = vdwg.mxu0
    %v685 = vadd.f32 %v671, %v682
    %v686 = vxor.u32 %v685, 2147483648
    %v687 = vmul.f32 %v686, 1.442695
    %v688 = vpow.pop %v687
    %v689 = vadd.f32 %v688, 1.0
    %v690 = vrcp.pop %v689
    %v691 = vmul.f32 %v689, %v690
    %v692 = vsub.f32 1.0, %v691
    %v693 = vmul.f32 %v690, %v692
    %v694 = vadd.f32 %v690, %v693
    %vm695 = vweird.f32 %v689
    %vm696 = vweird.f32 %v690
    %vm697 = vmor %vm695, %vm696
    %v698 = vsel %vm697, %v690, %v694
    %v699 = vand.u32 2147483647, %v689
    %vm700 = vcmp.eq.f32.partialorder %v699, 8.507059e+37
    %v701 = vand.u32 %v689, 2147483648
    %v702 = vor.u32 1.1754944e-38, %v701
    %v703 = vsel %vm700, %v702, %v698
    %v704 = vmul.f32 1.0, %v703
    %v705 = vtanh.pop %v685
    %v706 = vmul.f32 %v704, %v579
    %708 = vrot.lane.b32.xlu0 %v705, 32
    %v709 = vpop.permute.xlu0 %708
    %v711 = vmul.f32 %v704, %v709
    %713 = vrot.lane.b32.xlu0 %v711, 32
    %v714 = vpop.permute.xlu0 %713
    %v716 = vadd.f32 %v706, %v714
    %v717 = vtanh.pop %v716
    %719 = vrot.lane.b32.xlu0 %v717, 32
    %v720 = vpop.permute.xlu0 %719
    %v722 = vmul.f32 %v704, %v720
    %v723 = vpack.c.bf16 %v722, %v722
    %v724 = vpack.c.bf16 %v663, %v663
    %726 = vrot.lane.b32.xlu0 %v724, 64
    %v727 = vpop.permute.xlu0 %726
    %v729 = vsel %vm239, %v727, 0
    %731 = vmatpush.bf16.msra.mxu0 0
    %732 = vmatpush.bf16.msra.mxu0 0
    %733 = vmatpush.bf16.msra.mxu0 0
    %734 = vmatpush.bf16.msra.mxu0 0
    %735 = vmatpush.bf16.msra.mxu0 0
    %736 = vmatpush.bf16.msra.mxu0 0
    %737 = vmatpush.bf16.msra.mxu0 %v304
    %738 = vmatpush.bf16.msra.mxu0 %v303
    %739 = vmatmul.bf16.gmra.mxu0 %v729
    %v740 = vpop.f32.mrf.mxu0
    %v741 = vadd.f32 0.0, %v740
    %v742 = vpop.f32.mrf.mxu0
    %743 = vdwg.mxu0
    %745 = vrot.lane.b32.xlu0 %v723, 64
    %v746 = vpop.permute.xlu0 %745
    %v748 = vsel %vm239, %v746, 0
    %750 = vmatpush.bf16.msra.mxu0 0
    %751 = vmatpush.bf16.msra.mxu0 0
    %752 = vmatpush.bf16.msra.mxu0 0
    %753 = vmatpush.bf16.msra.mxu0 0
    %754 = vmatpush.bf16.msra.mxu0 0
    %755 = vmatpush.bf16.msra.mxu0 0
    %756 = vmatpush.bf16.msra.mxu0 %v332
    %757 = vmatpush.bf16.msra.mxu0 %v331
    %758 = vmatmul.bf16.gmra.mxu0 %v748
    %v759 = vpop.f32.mrf.mxu0
    %v760 = vadd.f32 %v741, %v759
    %v761 = vpop.f32.mrf.mxu0
    %762 = vdwg.mxu0
    %v763 = vadd.f32 %v760, %v224
    %v764 = vxor.u32 %v763, 2147483648
    %v765 = vmul.f32 %v764, 1.442695
    %v766 = vpow.pop %v765
    %v767 = vadd.f32 %v766, 1.0
    %v768 = vrcp.pop %v767
    %v769 = vmul.f32 %v767, %v768
    %v770 = vsub.f32 1.0, %v769
    %v771 = vmul.f32 %v768, %v770
    %v772 = vadd.f32 %v768, %v771
    %vm773 = vweird.f32 %v767
    %vm774 = vweird.f32 %v768
    %vm775 = vmor %vm773, %vm774
    %v776 = vsel %vm775, %v768, %v772
    %v777 = vand.u32 2147483647, %v767
    %vm778 = vcmp.eq.f32.partialorder %v777, 8.507059e+37
    %v779 = vand.u32 %v767, 2147483648
    %v780 = vor.u32 1.1754944e-38, %v779
    %v781 = vsel %vm778, %v780, %v776
    %v782 = vmul.f32 1.0, %v781
    %v783 = vtanh.pop %v763
    %v784 = vmul.f32 %v782, %v657
    %786 = vrot.lane.b32.xlu0 %v783, 32
    %v787 = vpop.permute.xlu0 %786
    %v789 = vmul.f32 %v782, %v787
    %791 = vrot.lane.b32.xlu0 %v789, 32
    %v792 = vpop.permute.xlu0 %791
    %v794 = vadd.f32 %v784, %v792
    %v795 = vtanh.pop %v794
    %797 = vrot.lane.b32.xlu0 %v795, 32
    %v798 = vpop.permute.xlu0 %797
    %v800 = vmul.f32 %v782, %v798
    %802 = vrot.lane.b32.xlu0 %v800, 64
    %v803 = vpop.permute.xlu0 %802
    %s805 = scalar_lea.vmem [#allocation3], 8
    %806 = vst.msk [vmem:[%s805] sm:$0x3] %vm394, %v803
    %s807 = scalar_lea.vmem [#allocation2], 8
    %v808 = vld [vmem:[%s807] sm:$0x3]
    %809 = vmatpush.bf16.msra.mxu0 0
    %810 = vmatpush.bf16.msra.mxu0 0
    %811 = vmatpush.bf16.msra.mxu0 0
    %812 = vmatpush.bf16.msra.mxu0 0
    %813 = vmatpush.bf16.msra.mxu0 0
    %814 = vmatpush.bf16.msra.mxu0 0
    %815 = vmatpush.bf16.msra.mxu0 %v236
    %816 = vmatpush.bf16.msra.mxu0 %v235
    %817 = vmatmul.bf16.gmra.mxu0 %v748
    %v818 = vpop.f32.mrf.mxu0
    %v819 = vadd.f32 0.0, %v818
    %v820 = vpop.f32.mrf.mxu0
    %821 = vdwg.mxu0
    %v822 = vadd.f32 %v808, %v819
    %v823 = vxor.u32 %v822, 2147483648
    %v824 = vmul.f32 %v823, 1.442695
    %v825 = vpow.pop %v824
    %v826 = vadd.f32 %v825, 1.0
    %v827 = vrcp.pop %v826
    %v828 = vmul.f32 %v826, %v827
    %v829 = vsub.f32 1.0, %v828
    %v830 = vmul.f32 %v827, %v829
    %v831 = vadd.f32 %v827, %v830
    %vm832 = vweird.f32 %v826
    %vm833 = vweird.f32 %v827
    %vm834 = vmor %vm832, %vm833
    %v835 = vsel %vm834, %v827, %v831
    %v836 = vand.u32 2147483647, %v826
    %vm837 = vcmp.eq.f32.partialorder %v836, 8.507059e+37
    %v838 = vand.u32 %v826, 2147483648
    %v839 = vor.u32 1.1754944e-38, %v838
    %v840 = vsel %vm837, %v839, %v835
    %v841 = vmul.f32 1.0, %v840
    %v842 = vtanh.pop %v822
    %v843 = vmul.f32 %v841, %v716
    %845 = vrot.lane.b32.xlu0 %v842, 32
    %v846 = vpop.permute.xlu0 %845
    %v848 = vmul.f32 %v841, %v846
    %850 = vrot.lane.b32.xlu0 %v848, 32
    %v851 = vpop.permute.xlu0 %850
    %v853 = vadd.f32 %v843, %v851
    %v854 = vtanh.pop %v853
    %856 = vrot.lane.b32.xlu0 %v854, 32
    %v857 = vpop.permute.xlu0 %856
    %v859 = vmul.f32 %v841, %v857
    %v860 = vpack.c.bf16 %v859, %v859
    %v861 = vpack.c.bf16 %v800, %v800
    %863 = vrot.lane.b32.xlu0 %v861, 64
    %v864 = vpop.permute.xlu0 %863
    %v866 = vsel %vm239, %v864, 0
    %868 = vmatpush.bf16.msra.mxu0 0
    %869 = vmatpush.bf16.msra.mxu0 0
    %870 = vmatpush.bf16.msra.mxu0 0
    %871 = vmatpush.bf16.msra.mxu0 0
    %872 = vmatpush.bf16.msra.mxu0 0
    %873 = vmatpush.bf16.msra.mxu0 0
    %874 = vmatpush.bf16.msra.mxu0 %v304
    %875 = vmatpush.bf16.msra.mxu0 %v303
    %876 = vmatmul.bf16.gmra.mxu0 %v866
    %v877 = vpop.f32.mrf.mxu0
    %v878 = vadd.f32 0.0, %v877
    %v879 = vpop.f32.mrf.mxu0
    %880 = vdwg.mxu0
    %882 = vrot.lane.b32.xlu0 %v860, 64
    %v883 = vpop.permute.xlu0 %882
    %v885 = vsel %vm239, %v883, 0
    %887 = vmatpush.bf16.msra.mxu0 0
    %888 = vmatpush.bf16.msra.mxu0 0
    %889 = vmatpush.bf16.msra.mxu0 0
    %890 = vmatpush.bf16.msra.mxu0 0
    %891 = vmatpush.bf16.msra.mxu0 0
    %892 = vmatpush.bf16.msra.mxu0 0
    %893 = vmatpush.bf16.msra.mxu0 %v332
    %894 = vmatpush.bf16.msra.mxu0 %v331
    %895 = vmatmul.bf16.gmra.mxu0 %v885
    %v896 = vpop.f32.mrf.mxu0
    %v897 = vadd.f32 %v878, %v896
    %v898 = vpop.f32.mrf.mxu0
    %899 = vdwg.mxu0
    %v900 = vadd.f32 %v897, %v224
    %v901 = vxor.u32 %v900, 2147483648
    %v902 = vmul.f32 %v901, 1.442695
    %v903 = vpow.pop %v902
    %v904 = vadd.f32 %v903, 1.0
    %v905 = vrcp.pop %v904
    %v906 = vmul.f32 %v904, %v905
    %v907 = vsub.f32 1.0, %v906
    %v908 = vmul.f32 %v905, %v907
    %v909 = vadd.f32 %v905, %v908
    %vm910 = vweird.f32 %v904
    %vm911 = vweird.f32 %v905
    %vm912 = vmor %vm910, %vm911
    %v913 = vsel %vm912, %v905, %v909
    %v914 = vand.u32 2147483647, %v904
    %vm915 = vcmp.eq.f32.partialorder %v914, 8.507059e+37
    %v916 = vand.u32 %v904, 2147483648
    %v917 = vor.u32 1.1754944e-38, %v916
    %v918 = vsel %vm915, %v917, %v913
    %v919 = vmul.f32 1.0, %v918
    %v920 = vtanh.pop %v900
    %v921 = vmul.f32 %v919, %v794
    %923 = vrot.lane.b32.xlu0 %v920, 32
    %v924 = vpop.permute.xlu0 %923
    %v926 = vmul.f32 %v919, %v924
    %928 = vrot.lane.b32.xlu0 %v926, 32
    %v929 = vpop.permute.xlu0 %928
    %v931 = vadd.f32 %v921, %v929
    %v932 = vtanh.pop %v931
    %934 = vrot.lane.b32.xlu0 %v932, 32
    %v935 = vpop.permute.xlu0 %934
    %v937 = vmul.f32 %v919, %v935
    %939 = vrot.lane.b32.xlu0 %v937, 64
    %v940 = vpop.permute.xlu0 %939
    %s942 = scalar_lea.vmem [#allocation3], 6
    %943 = vst.msk [vmem:[%s942] sm:$0x3] %vm394, %v940
    %s944 = scalar_lea.vmem [#allocation2], 10
    %v945 = vld [vmem:[%s944] sm:$0x3]
    %946 = vmatpush.bf16.msra.mxu0 0
    %947 = vmatpush.bf16.msra.mxu0 0
    %948 = vmatpush.bf16.msra.mxu0 0
    %949 = vmatpush.bf16.msra.mxu0 0
    %950 = vmatpush.bf16.msra.mxu0 0
    %951 = vmatpush.bf16.msra.mxu0 0
    %952 = vmatpush.bf16.msra.mxu0 %v236
    %953 = vmatpush.bf16.msra.mxu0 %v235
    %954 = vmatmul.bf16.gmra.mxu0 %v885
    %v955 = vpop.f32.mrf.mxu0
    %v956 = vadd.f32 0.0, %v955
    %v957 = vpop.f32.mrf.mxu0
    %958 = vdwg.mxu0
    %v959 = vadd.f32 %v945, %v956
    %v960 = vxor.u32 %v959, 2147483648
    %v961 = vmul.f32 %v960, 1.442695
    %v962 = vpow.pop %v961
    %v963 = vadd.f32 %v962, 1.0
    %v964 = vrcp.pop %v963
    %v965 = vmul.f32 %v963, %v964
    %v966 = vsub.f32 1.0, %v965
    %v967 = vmul.f32 %v964, %v966
    %v968 = vadd.f32 %v964, %v967
    %vm969 = vweird.f32 %v963
    %vm970 = vweird.f32 %v964
    %vm971 = vmor %vm969, %vm970
    %v972 = vsel %vm971, %v964, %v968
    %v973 = vand.u32 2147483647, %v963
    %vm974 = vcmp.eq.f32.partialorder %v973, 8.507059e+37
    %v975 = vand.u32 %v963, 2147483648
    %v976 = vor.u32 1.1754944e-38, %v975
    %v977 = vsel %vm974, %v976, %v972
    %v978 = vmul.f32 1.0, %v977
    %v979 = vtanh.pop %v959
    %v980 = vmul.f32 %v978, %v853
    %982 = vrot.lane.b32.xlu0 %v979, 32
    %v983 = vpop.permute.xlu0 %982
    %v985 = vmul.f32 %v978, %v983
    %987 = vrot.lane.b32.xlu0 %v985, 32
    %v988 = vpop.permute.xlu0 %987
    %v990 = vadd.f32 %v980, %v988
    %v991 = vtanh.pop %v990
    %993 = vrot.lane.b32.xlu0 %v991, 32
    %v994 = vpop.permute.xlu0 %993
    %v996 = vmul.f32 %v978, %v994
    %v997 = vpack.c.bf16 %v996, %v996
    %v998 = vpack.c.bf16 %v937, %v937
    %1000 = vrot.lane.b32.xlu0 %v998, 64
    %v1001 = vpop.permute.xlu0 %1000
    %v1003 = vsel %vm239, %v1001, 0
    %1005 = vmatpush.bf16.msra.mxu0 0
    %1006 = vmatpush.bf16.msra.mxu0 0
    %1007 = vmatpush.bf16.msra.mxu0 0
    %1008 = vmatpush.bf16.msra.mxu0 0
    %1009 = vmatpush.bf16.msra.mxu0 0
    %1010 = vmatpush.bf16.msra.mxu0 0
    %1011 = vmatpush.bf16.msra.mxu0 %v304
    %1012 = vmatpush.bf16.msra.mxu0 %v303
    %1013 = vmatmul.bf16.gmra.mxu0 %v1003
    %v1014 = vpop.f32.mrf.mxu0
    %v1015 = vadd.f32 0.0, %v1014
    %v1016 = vpop.f32.mrf.mxu0
    %1017 = vdwg.mxu0
    %1019 = vrot.lane.b32.xlu0 %v997, 64
    %v1020 = vpop.permute.xlu0 %1019
    %v1022 = vsel %vm239, %v1020, 0
    %1024 = vmatpush.bf16.msra.mxu0 0
    %1025 = vmatpush.bf16.msra.mxu0 0
    %1026 = vmatpush.bf16.msra.mxu0 0
    %1027 = vmatpush.bf16.msra.mxu0 0
    %1028 = vmatpush.bf16.msra.mxu0 0
    %1029 = vmatpush.bf16.msra.mxu0 0
    %1030 = vmatpush.bf16.msra.mxu0 %v332
    %1031 = vmatpush.bf16.msra.mxu0 %v331
    %1032 = vmatmul.bf16.gmra.mxu0 %v1022
    %v1033 = vpop.f32.mrf.mxu0
    %v1034 = vadd.f32 %v1015, %v1033
    %v1035 = vpop.f32.mrf.mxu0
    %1036 = vdwg.mxu0
    %v1037 = vadd.f32 %v1034, %v224
    %v1038 = vxor.u32 %v1037, 2147483648
    %v1039 = vmul.f32 %v1038, 1.442695
    %v1040 = vpow.pop %v1039
    %v1041 = vadd.f32 %v1040, 1.0
    %v1042 = vrcp.pop %v1041
    %v1043 = vmul.f32 %v1041, %v1042
    %v1044 = vsub.f32 1.0, %v1043
    %v1045 = vmul.f32 %v1042, %v1044
    %v1046 = vadd.f32 %v1042, %v1045
    %vm1047 = vweird.f32 %v1041
    %vm1048 = vweird.f32 %v1042
    %vm1049 = vmor %vm1047, %vm1048
    %v1050 = vsel %vm1049, %v1042, %v1046
    %v1051 = vand.u32 2147483647, %v1041
    %vm1052 = vcmp.eq.f32.partialorder %v1051, 8.507059e+37
    %v1053 = vand.u32 %v1041, 2147483648
    %v1054 = vor.u32 1.1754944e-38, %v1053
    %v1055 = vsel %vm1052, %v1054, %v1050
    %v1056 = vmul.f32 1.0, %v1055
    %v1057 = vtanh.pop %v1037
    %v1058 = vmul.f32 %v1056, %v931
    %1060 = vrot.lane.b32.xlu0 %v1057, 32
    %v1061 = vpop.permute.xlu0 %1060
    %v1063 = vmul.f32 %v1056, %v1061
    %1065 = vrot.lane.b32.xlu0 %v1063, 32
    %v1066 = vpop.permute.xlu0 %1065
    %v1068 = vadd.f32 %v1058, %v1066
    %v1069 = vtanh.pop %v1068
    %1071 = vrot.lane.b32.xlu0 %v1069, 32
    %v1072 = vpop.permute.xlu0 %1071
    %v1074 = vmul.f32 %v1056, %v1072
    %1076 = vrot.lane.b32.xlu0 %v1074, 64
    %v1077 = vpop.permute.xlu0 %1076
    %s1079 = scalar_lea.vmem [#allocation3], 4
    %1080 = vst.msk [vmem:[%s1079] sm:$0x3] %vm394, %v1077
    %s1081 = scalar_lea.vmem [#allocation2], 12
    %v1082 = vld [vmem:[%s1081] sm:$0x3]
    %1083 = vmatpush.bf16.msra.mxu0 0
    %1084 = vmatpush.bf16.msra.mxu0 0
    %1085 = vmatpush.bf16.msra.mxu0 0
    %1086 = vmatpush.bf16.msra.mxu0 0
    %1087 = vmatpush.bf16.msra.mxu0 0
    %1088 = vmatpush.bf16.msra.mxu0 0
    %1089 = vmatpush.bf16.msra.mxu0 %v236
    %1090 = vmatpush.bf16.msra.mxu0 %v235
    %1091 = vmatmul.bf16.gmra.mxu0 %v1022
    %v1092 = vpop.f32.mrf.mxu0
    %v1093 = vadd.f32 0.0, %v1092
    %v1094 = vpop.f32.mrf.mxu0
    %1095 = vdwg.mxu0
    %v1096 = vadd.f32 %v1082, %v1093
    %v1097 = vxor.u32 %v1096, 2147483648
    %v1098 = vmul.f32 %v1097, 1.442695
    %v1099 = vpow.pop %v1098
    %v1100 = vadd.f32 %v1099, 1.0
    %v1101 = vrcp.pop %v1100
    %v1102 = vmul.f32 %v1100, %v1101
    %v1103 = vsub.f32 1.0, %v1102
    %v1104 = vmul.f32 %v1101, %v1103
    %v1105 = vadd.f32 %v1101, %v1104
    %vm1106 = vweird.f32 %v1100
    %vm1107 = vweird.f32 %v1101
    %vm1108 = vmor %vm1106, %vm1107
    %v1109 = vsel %vm1108, %v1101, %v1105
    %v1110 = vand.u32 2147483647, %v1100
    %vm1111 = vcmp.eq.f32.partialorder %v1110, 8.507059e+37
    %v1112 = vand.u32 %v1100, 2147483648
    %v1113 = vor.u32 1.1754944e-38, %v1112
    %v1114 = vsel %vm1111, %v1113, %v1109
    %v1115 = vmul.f32 1.0, %v1114
    %v1116 = vtanh.pop %v1096
    %v1117 = vmul.f32 %v1115, %v990
    %1119 = vrot.lane.b32.xlu0 %v1116, 32
    %v1120 = vpop.permute.xlu0 %1119
    %v1122 = vmul.f32 %v1115, %v1120
    %1124 = vrot.lane.b32.xlu0 %v1122, 32
    %v1125 = vpop.permute.xlu0 %1124
    %v1127 = vadd.f32 %v1117, %v1125
    %v1128 = vtanh.pop %v1127
    %1130 = vrot.lane.b32.xlu0 %v1128, 32
    %v1131 = vpop.permute.xlu0 %1130
    %v1133 = vmul.f32 %v1115, %v1131
    %v1134 = vpack.c.bf16 %v1133, %v1133
    %v1135 = vpack.c.bf16 %v1074, %v1074
    %1137 = vrot.lane.b32.xlu0 %v1135, 64
    %v1138 = vpop.permute.xlu0 %1137
    %v1140 = vsel %vm239, %v1138, 0
    %1142 = vmatpush.bf16.msra.mxu0 0
    %1143 = vmatpush.bf16.msra.mxu0 0
    %1144 = vmatpush.bf16.msra.mxu0 0
    %1145 = vmatpush.bf16.msra.mxu0 0
    %1146 = vmatpush.bf16.msra.mxu0 0
    %1147 = vmatpush.bf16.msra.mxu0 0
    %1148 = vmatpush.bf16.msra.mxu0 %v304
    %1149 = vmatpush.bf16.msra.mxu0 %v303
    %1150 = vmatmul.bf16.gmra.mxu0 %v1140
    %v1151 = vpop.f32.mrf.mxu0
    %v1152 = vadd.f32 0.0, %v1151
    %v1153 = vpop.f32.mrf.mxu0
    %1154 = vdwg.mxu0
    %1156 = vrot.lane.b32.xlu0 %v1134, 64
    %v1157 = vpop.permute.xlu0 %1156
    %v1159 = vsel %vm239, %v1157, 0
    %1161 = vmatpush.bf16.msra.mxu0 0
    %1162 = vmatpush.bf16.msra.mxu0 0
    %1163 = vmatpush.bf16.msra.mxu0 0
    %1164 = vmatpush.bf16.msra.mxu0 0
    %1165 = vmatpush.bf16.msra.mxu0 0
    %1166 = vmatpush.bf16.msra.mxu0 0
    %1167 = vmatpush.bf16.msra.mxu0 %v332
    %1168 = vmatpush.bf16.msra.mxu0 %v331
    %1169 = vmatmul.bf16.gmra.mxu0 %v1159
    %v1170 = vpop.f32.mrf.mxu0
    %v1171 = vadd.f32 %v1152, %v1170
    %v1172 = vpop.f32.mrf.mxu0
    %1173 = vdwg.mxu0
    %v1174 = vadd.f32 %v1171, %v224
    %v1175 = vxor.u32 %v1174, 2147483648
    %v1176 = vmul.f32 %v1175, 1.442695
    %v1177 = vpow.pop %v1176
    %v1178 = vadd.f32 %v1177, 1.0
    %v1179 = vrcp.pop %v1178
    %v1180 = vmul.f32 %v1178, %v1179
    %v1181 = vsub.f32 1.0, %v1180
    %v1182 = vmul.f32 %v1179, %v1181
    %v1183 = vadd.f32 %v1179, %v1182
    %vm1184 = vweird.f32 %v1178
    %vm1185 = vweird.f32 %v1179
    %vm1186 = vmor %vm1184, %vm1185
    %v1187 = vsel %vm1186, %v1179, %v1183
    %v1188 = vand.u32 2147483647, %v1178
    %vm1189 = vcmp.eq.f32.partialorder %v1188, 8.507059e+37
    %v1190 = vand.u32 %v1178, 2147483648
    %v1191 = vor.u32 1.1754944e-38, %v1190
    %v1192 = vsel %vm1189, %v1191, %v1187
    %v1193 = vmul.f32 1.0, %v1192
    %v1194 = vtanh.pop %v1174
    %v1195 = vmul.f32 %v1193, %v1068
    %1197 = vrot.lane.b32.xlu0 %v1194, 32
    %v1198 = vpop.permute.xlu0 %1197
    %v1200 = vmul.f32 %v1193, %v1198
    %1202 = vrot.lane.b32.xlu0 %v1200, 32
    %v1203 = vpop.permute.xlu0 %1202
    %v1205 = vadd.f32 %v1195, %v1203
    %v1206 = vtanh.pop %v1205
    %1208 = vrot.lane.b32.xlu0 %v1206, 32
    %v1209 = vpop.permute.xlu0 %1208
    %v1211 = vmul.f32 %v1193, %v1209
    %1213 = vrot.lane.b32.xlu0 %v1211, 64
    %v1214 = vpop.permute.xlu0 %1213
    %s1216 = scalar_lea.vmem [#allocation3], 2
    %1217 = vst.msk [vmem:[%s1216] sm:$0x3] %vm394, %v1214
    %s1218 = scalar_lea.vmem [#allocation2], 14
    %v1219 = vld [vmem:[%s1218] sm:$0x3]
    %1220 = vmatpush.bf16.msra.mxu0 0
    %1221 = vmatpush.bf16.msra.mxu0 0
    %1222 = vmatpush.bf16.msra.mxu0 0
    %1223 = vmatpush.bf16.msra.mxu0 0
    %1224 = vmatpush.bf16.msra.mxu0 0
    %1225 = vmatpush.bf16.msra.mxu0 0
    %1226 = vmatpush.bf16.msra.mxu0 %v236
    %1227 = vmatpush.bf16.msra.mxu0 %v235
    %1228 = vmatmul.bf16.gmra.mxu0 %v1159
    %v1229 = vpop.f32.mrf.mxu0
    %v1230 = vadd.f32 0.0, %v1229
    %v1231 = vpop.f32.mrf.mxu0
    %1232 = vdwg.mxu0
    %v1233 = vadd.f32 %v1219, %v1230
    %v1234 = vxor.u32 %v1233, 2147483648
    %v1235 = vmul.f32 %v1234, 1.442695
    %v1236 = vpow.pop %v1235
    %v1237 = vadd.f32 %v1236, 1.0
    %v1238 = vrcp.pop %v1237
    %v1239 = vmul.f32 %v1237, %v1238
    %v1240 = vsub.f32 1.0, %v1239
    %v1241 = vmul.f32 %v1238, %v1240
    %v1242 = vadd.f32 %v1238, %v1241
    %vm1243 = vweird.f32 %v1237
    %vm1244 = vweird.f32 %v1238
    %vm1245 = vmor %vm1243, %vm1244
    %v1246 = vsel %vm1245, %v1238, %v1242
    %v1247 = vand.u32 2147483647, %v1237
    %vm1248 = vcmp.eq.f32.partialorder %v1247, 8.507059e+37
    %v1249 = vand.u32 %v1237, 2147483648
    %v1250 = vor.u32 1.1754944e-38, %v1249
    %v1251 = vsel %vm1248, %v1250, %v1246
    %v1252 = vmul.f32 1.0, %v1251
    %v1253 = vtanh.pop %v1233
    %v1254 = vmul.f32 %v1252, %v1127
    %1256 = vrot.lane.b32.xlu0 %v1253, 32
    %v1257 = vpop.permute.xlu0 %1256
    %v1259 = vmul.f32 %v1252, %v1257
    %1261 = vrot.lane.b32.xlu0 %v1259, 32
    %v1262 = vpop.permute.xlu0 %1261
    %v1264 = vadd.f32 %v1254, %v1262
    %v1265 = vtanh.pop %v1264
    %1267 = vrot.lane.b32.xlu0 %v1265, 32
    %v1268 = vpop.permute.xlu0 %1267
    %v1270 = vmul.f32 %v1252, %v1268
    %v1271 = vpack.c.bf16 %v1270, %v1270
    %v1272 = vpack.c.bf16 %v1211, %v1211
    %1274 = vrot.lane.b32.xlu0 %v1272, 64
    %v1275 = vpop.permute.xlu0 %1274
    %v1277 = vsel %vm239, %v1275, 0
    %1279 = vmatpush.bf16.msra.mxu0 0
    %1280 = vmatpush.bf16.msra.mxu0 0
    %1281 = vmatpush.bf16.msra.mxu0 0
    %1282 = vmatpush.bf16.msra.mxu0 0
    %1283 = vmatpush.bf16.msra.mxu0 0
    %1284 = vmatpush.bf16.msra.mxu0 0
    %1285 = vmatpush.bf16.msra.mxu0 %v304
    %1286 = vmatpush.bf16.msra.mxu0 %v303
    %1287 = vmatmul.bf16.gmra.mxu0 %v1277
    %v1288 = vpop.f32.mrf.mxu0
    %v1289 = vadd.f32 0.0, %v1288
    %v1290 = vpop.f32.mrf.mxu0
    %1291 = vdwg.mxu0
    %1293 = vrot.lane.b32.xlu0 %v1271, 64
    %v1294 = vpop.permute.xlu0 %1293
    %v1296 = vsel %vm239, %v1294, 0
    %1298 = vmatpush.bf16.msra.mxu0 0
    %1299 = vmatpush.bf16.msra.mxu0 0
    %1300 = vmatpush.bf16.msra.mxu0 0
    %1301 = vmatpush.bf16.msra.mxu0 0
    %1302 = vmatpush.bf16.msra.mxu0 0
    %1303 = vmatpush.bf16.msra.mxu0 0
    %1304 = vmatpush.bf16.msra.mxu0 %v332
    %1305 = vmatpush.bf16.msra.mxu0 %v331
    %1306 = vmatmul.bf16.gmra.mxu0 %v1296
    %v1307 = vpop.f32.mrf.mxu0
    %v1308 = vadd.f32 %v1289, %v1307
    %v1309 = vpop.f32.mrf.mxu0
    %1310 = vdwg.mxu0
    %v1311 = vadd.f32 %v1308, %v224
    %v1312 = vxor.u32 %v1311, 2147483648
    %v1313 = vmul.f32 %v1312, 1.442695
    %v1314 = vpow.pop %v1313
    %v1315 = vadd.f32 %v1314, 1.0
    %v1316 = vrcp.pop %v1315
    %v1317 = vmul.f32 %v1315, %v1316
    %v1318 = vsub.f32 1.0, %v1317
    %v1319 = vmul.f32 %v1316, %v1318
    %v1320 = vadd.f32 %v1316, %v1319
    %vm1321 = vweird.f32 %v1315
    %vm1322 = vweird.f32 %v1316
    %vm1323 = vmor %vm1321, %vm1322
    %v1324 = vsel %vm1323, %v1316, %v1320
    %v1325 = vand.u32 2147483647, %v1315
    %vm1326 = vcmp.eq.f32.partialorder %v1325, 8.507059e+37
    %v1327 = vand.u32 %v1315, 2147483648
    %v1328 = vor.u32 1.1754944e-38, %v1327
    %v1329 = vsel %vm1326, %v1328, %v1324
    %v1330 = vmul.f32 1.0, %v1329
    %v1331 = vtanh.pop %v1311
    %v1332 = vmul.f32 %v1330, %v1205
    %1334 = vrot.lane.b32.xlu0 %v1331, 32
    %v1335 = vpop.permute.xlu0 %1334
    %v1337 = vmul.f32 %v1330, %v1335
    %1339 = vrot.lane.b32.xlu0 %v1337, 32
    %v1340 = vpop.permute.xlu0 %1339
    %v1342 = vadd.f32 %v1332, %v1340
    %v1343 = vtanh.pop %v1342
    %1345 = vrot.lane.b32.xlu0 %v1343, 32
    %v1346 = vpop.permute.xlu0 %1345
    %v1348 = vmul.f32 %v1330, %v1346
    %1350 = vrot.lane.b32.xlu0 %v1348, 64
    %v1351 = vpop.permute.xlu0 %1350
    %1353 = vst.msk [vmem:[#allocation3] sm:$0x3] %vm394, %v1351
    %v1354 = vld [vmem:[#allocation3] sm:$0x3]
    %v1355 = vld [vmem:[#allocation3 + $0x2] sm:$0x3]
    %v1356 = vld [vmem:[#allocation3 + $0x4] sm:$0x3]
    %v1357 = vld [vmem:[#allocation3 + $0x6] sm:$0x3]
    %v1358 = vld [vmem:[#allocation3 + $0x8] sm:$0x3]
    %v1359 = vld [vmem:[#allocation3 + $0xa] sm:$0x3]
    %v1360 = vld [vmem:[#allocation3 + $0xc] sm:$0x3]
    %v1361 = vld [vmem:[#allocation3 + $0xe] sm:$0x3]
    %v1362 = vrot.slane %v1356, 4
    %v1363 = vsel %vm78, %v1362, %v1354
    %v1365 = vunpack.c.l.s4 1983009808
    %v1366 = vunpack.c.0.s8 %v1365
    %v1367 = vperm.slane %v1363, %v1366
    %v1368 = vrot.slane %v1357, 4
    %v1369 = vsel %vm78, %v1368, %v1355
    %v1371 = vunpack.c.l.s4 1983009808
    %v1372 = vunpack.c.0.s8 %v1371
    %v1373 = vperm.slane %v1369, %v1372
    %v1374 = vrot.slane %v1360, 4
    %v1375 = vsel %vm78, %v1374, %v1358
    %v1377 = vunpack.c.l.s4 1983009808
    %v1378 = vunpack.c.0.s8 %v1377
    %v1379 = vperm.slane %v1375, %v1378
    %v1380 = vrot.slane %v1361, 4
    %v1381 = vsel %vm78, %v1380, %v1359
    %v1383 = vunpack.c.l.s4 1983009808
    %v1384 = vunpack.c.0.s8 %v1383
    %v1385 = vperm.slane %v1381, %v1384
    %v1386 = vrot.slane %v1373, 4
    %v1387 = vsel %vm78, %v1386, %v1367
    %v1389 = vunpack.c.l.s4 1934713408
    %v1390 = vunpack.c.0.s8 %v1389
    %v1391 = vperm.slane %v1387, %v1390
    %v1392 = vrot.slane %v1385, 4
    %v1393 = vsel %vm78, %v1392, %v1379
    %v1395 = vunpack.c.l.s4 1934713408
    %v1396 = vunpack.c.0.s8 %v1395
    %v1397 = vperm.slane %v1393, %v1396
    %v1398 = vrot.slane %v1397, 4
    %v1399 = vsel %vm78, %v1398, %v1391
    %v1400 = vrot.slane %v1391, 4
    %v1401 = vsel %vm78, %v1397, %v1400
    %1402 = vst.msk [vmem:[#allocation10] sm:$0xff] %vm239, %v1399
    %1403 = vst.msk [vmem:[#allocation10 + $0x8] sm:$0xff] %vm239, %v1401
    %1405 = vrot.lane.b32.xlu0 %v1270, 64
    %v1406 = vpop.permute.xlu0 %1405
    %1408 = vst.msk [vmem:[#allocation11] sm:$0x3] %vm394, %v1406
    %s1409 = scalar_lea.vmem [#allocation11], 2
    %1410 = vst.msk [vmem:[%s1409] sm:$0x3] %vm394, %v1351
    %1412 = vrot.lane.b32.xlu0 %v1264, 96
    %v1413 = vpop.permute.xlu0 %1412
    %1415 = vst.msk [vmem:[#allocation13] sm:$0x3] %vm394, %v1413
    %1417 = vrot.lane.b32.xlu0 %v1342, 96
    %v1418 = vpop.permute.xlu0 %1417
    %s1420 = scalar_lea.vmem [#allocation13], 2
    %1421 = vst.msk [vmem:[%s1420] sm:$0x3] %vm394, %v1418
    // Predicated region
    $region42: #{encoder_rnn_forward.1} parent=1 // pred_check
      _
    $region43: #{encoder_rnn_forward.1} parent=1 // pred_check_branch
      %1423 = sbr.rel (0) target = $region45
    $region44: #{encoder_rnn_forward.1} parent=1 // pred_region
      %1425 = vsyncadd [#allocation6], 0
      %s1426 = sshll.u32 [#allocation10], 4
      %s1427 = int_to_ptr.vmem [resolvable:$true] %s1426
      %s1428 = sshll.u32 %s7, 4
      %s1429 = int_to_ptr.hbm [resolvable:$true] %s1428
      %1434 = dma.vmem_to_hbm [thread:$0]  %s1427, 256, %s1429, [#allocation6], 128, 128, 8
    $region45: #{encoder_rnn_forward.1} parent=1 // pred_fallthru
      _
    // Predicated region
    $region46: #{encoder_rnn_forward.1} parent=1 // pred_check
      _
    $region47: #{encoder_rnn_forward.1} parent=1 // pred_check_branch
      %1436 = sbr.rel (0) target = $region49
    $region48: #{encoder_rnn_forward.1} parent=1 // pred_region
      %1438 = vsyncadd [#allocation12], 0
      %s1439 = sshll.u32 [#allocation11], 4
      %s1440 = int_to_ptr.vmem [resolvable:$true] %s1439
      %s1441 = sshll.u32 %s8, 4
      %s1442 = int_to_ptr.hbm [resolvable:$true] %s1441
      %1447 = dma.vmem_to_hbm [thread:$0]  %s1440, 64, %s1442, [#allocation12], 32, 32, 2
    $region49: #{encoder_rnn_forward.1} parent=1 // pred_fallthru
      _
    // Predicated region
    $region50: #{encoder_rnn_forward.1} parent=1 // pred_check
      _
    $region51: #{encoder_rnn_forward.1} parent=1 // pred_check_branch
      %1449 = sbr.rel (0) target = $region53
    $region52: #{encoder_rnn_forward.1} parent=1 // pred_region
      %1451 = vsyncadd [#allocation12], 0
      %s1452 = sshll.u32 [#allocation13], 4
      %s1453 = int_to_ptr.vmem [resolvable:$true] %s1452
      %s1454 = sshll.u32 %s9, 4
      %s1455 = int_to_ptr.hbm [resolvable:$true] %s1454
      %1460 = dma.vmem_to_hbm [thread:$0]  %s1453, 64, %s1455, [#allocation12], 32, 32, 2
    $region53: #{encoder_rnn_forward.1} parent=1 // pred_fallthru
      _
    // Predicated region
    $region54: #{encoder_rnn_forward.1} parent=1 // pred_check
      _
    $region55: #{encoder_rnn_forward.1} parent=1 // pred_check_branch
      %1462 = sbr.rel (0) target = $region57
    $region56: #{encoder_rnn_forward.1} parent=1 // pred_region
      %1464 = dma.done [#allocation6], 256
    $region57: #{encoder_rnn_forward.1} parent=1 // pred_fallthru
      _
    // Predicated region
    $region58: #{encoder_rnn_forward.1} parent=1 // pred_check
      _
    $region59: #{encoder_rnn_forward.1} parent=1 // pred_check_branch
      %1466 = sbr.rel (0) target = $region61
    $region60: #{encoder_rnn_forward.1} parent=1 // pred_region
      %1468 = dma.done [#allocation12], 64
    $region61: #{encoder_rnn_forward.1} parent=1 // pred_fallthru
      _
    // Predicated region
    $region62: #{encoder_rnn_forward.1} parent=1 // pred_check
      _
    $region63: #{encoder_rnn_forward.1} parent=1 // pred_check_branch
      %1470 = sbr.rel (0) target = $region65
    $region64: #{encoder_rnn_forward.1} parent=1 // pred_region
      %1472 = dma.done [#allocation12], 64
    $region65: #{encoder_rnn_forward.1} parent=1 // pred_fallthru
      _
    %1473 = vsyncpa [#allocation5], 1
    %1474 = vsyncpa [#allocation8], 1
    %1475 = vsyncpa [#allocation6], 1
    %1476 = vsyncpa [#allocation12], 1

</llo_original>
